<compile_context>
chip_gen: v7x
topology: tpu7x:2x2x1
jax: 0.10.0
libtpu: 0.0.40
codegen_flags: <defaults>
</compile_context>

<pallas_src>
import jax
import jax.numpy as jnp
import numpy as np
from jax.experimental import pallas as pl
from jax.experimental.pallas import tpu as pltpu


def _round_up(n, m):
    return ((n + m - 1) // m) * m


# ----------------------------- kernel ---------------------------------------
def _make_kernel(n_layer, DP, OPP):
    def kernel(x_ref, eps_ref, h0_ref, w_ref, b_ref, wh_ref, bh_ref,
               y_ref, hout_ref, h_scr):
        t = pl.program_id(0)

        # Initialize the hidden-state carry (VMEM scratch) on the first step.
        @pl.when(t == 0)
        def _():
            h_scr[...] = h0_ref[...]

        h = x_ref[0]                                  # (BP, DP)
        for i in range(n_layer):                      # static unroll over layers
            h_prev = h_scr[i]                         # (BP, DP)
            inp = jnp.concatenate([h, h_prev], axis=-1)        # (BP, 2*DP)
            g = jnp.dot(inp, w_ref[i],
                        preferred_element_type=jnp.float32) + b_ref[i]
            r = jax.nn.sigmoid(g[:, 0:DP])
            zg = jax.nn.sigmoid(g[:, DP:2 * DP])
            ng = jnp.tanh(g[:, 2 * DP:3 * DP] + r * g[:, 3 * DP:4 * DP])
            h_new = (1.0 - zg) * ng + zg * h_prev
            h_scr[i] = h_new
            h = h_new

        # fused mu/logvar head
        head = jnp.dot(h, wh_ref[...],
                       preferred_element_type=jnp.float32) + bh_ref[...]
        mu = head[:, 0:OPP]
        logvar = head[:, OPP:2 * OPP]
        # reparameterize: z = eps * exp(0.5*logvar) + mu
        z = eps_ref[0] * jnp.exp(0.5 * logvar) + mu

        # single lane-dense store per step: [z | mu | logvar]
        y_ref[0] = jnp.concatenate([z, mu, logvar], axis=-1)

        # write the final hidden state once, on the last timestep
        @pl.when(t == pl.num_programs(0) - 1)
        def _():
            hout_ref[...] = h_scr[...]

    return kernel


# ----------------------------- param packing --------------------------------
def _pack_params(params, in_dim, hidden_dim, out_dim, n_layer, DP, OPP):
    H = hidden_dim
    W = np.zeros((n_layer, 2 * DP, 4 * DP), np.float32)
    Bb = np.zeros((n_layer, 1, 4 * DP), np.float32)
    for i in range(n_layer):
        p = params["gru"][i]
        d_in = in_dim if i == 0 else hidden_dim
        w_ih = np.asarray(p["w_ih"], np.float32)          # (d_in, 3H)  [r|z|n]
        w_hh = np.asarray(p["w_hh"], np.float32)          # (H,   3H)
        b_ih = np.asarray(p["b_ih"], np.float32).reshape(3 * H)
        b_hh = np.asarray(p["b_hh"], np.float32).reshape(3 * H)
        # r gate (input + hidden fused in one column block)
        W[i, 0:d_in, 0:H] = w_ih[:, 0:H]
        W[i, DP:DP + H, 0:H] = w_hh[:, 0:H]
        # z gate
        W[i, 0:d_in, DP:DP + H] = w_ih[:, H:2 * H]
        W[i, DP:DP + H, DP:DP + H] = w_hh[:, H:2 * H]
        # n gate: input part and hidden part kept in separate column blocks
        W[i, 0:d_in, 2 * DP:2 * DP + H] = w_ih[:, 2 * H:3 * H]
        W[i, DP:DP + H, 3 * DP:3 * DP + H] = w_hh[:, 2 * H:3 * H]
        # biases: r/z pre-summed, n parts separate
        Bb[i, 0, 0:H] = b_ih[0:H] + b_hh[0:H]
        Bb[i, 0, DP:DP + H] = b_ih[H:2 * H] + b_hh[H:2 * H]
        Bb[i, 0, 2 * DP:2 * DP + H] = b_ih[2 * H:3 * H]
        Bb[i, 0, 3 * DP:3 * DP + H] = b_hh[2 * H:3 * H]

    WH = np.zeros((DP, 2 * OPP), np.float32)
    BH = np.zeros((1, 2 * OPP), np.float32)
    WH[0:H, 0:out_dim] = np.asarray(params["w_mu"], np.float32)
    WH[0:H, OPP:OPP + out_dim] = np.asarray(params["w_lv"], np.float32)
    BH[0, 0:out_dim] = np.asarray(params["b_mu"], np.float32).reshape(-1)
    BH[0, OPP:OPP + out_dim] = np.asarray(params["b_lv"], np.float32).reshape(-1)
    return (jnp.asarray(W), jnp.asarray(Bb), jnp.asarray(WH), jnp.asarray(BH))


# ----------------------------- wrapper ---------------------------------------
def gaussian_recurrent_cell(x_seq, hidden, params, eps_seq, *, training=True):
    """Run the cell over a sequence.

    x_seq:   (T, B, in_dim)     eps_seq: (T, B, out_dim)
    hidden:  list of n_layer arrays (B, hidden_dim)
    Returns ((z, mu, logvar) each (T, B, out_dim), new_hidden list).
    """
    T, B, in_dim = x_seq.shape
    n_layer = len(hidden)
    H = hidden[0].shape[-1]
    out_dim = eps_seq.shape[-1]

    DP = max(_round_up(in_dim, 128), _round_up(H, 128))
    OPP = _round_up(out_dim, 128)
    BP = _round_up(B, 8)

    W, Bb, WH, BH = _pack_params(params, in_dim, H, out_dim, n_layer, DP, OPP)

    xp = jnp.zeros((T, BP, DP), jnp.float32).at[:, :B, :in_dim].set(x_seq)
    ep = jnp.zeros((T, BP, OPP), jnp.float32).at[:, :B, :out_dim].set(eps_seq)
    h0 = jnp.zeros((n_layer, BP, DP), jnp.float32)
    for i in range(n_layer):
        h0 = h0.at[i, :B, :H].set(hidden[i])

    y, hout = pl.pallas_call(
        _make_kernel(n_layer, DP, OPP),
        out_shape=(jax.ShapeDtypeStruct((T, BP, 3 * OPP), jnp.float32),
                   jax.ShapeDtypeStruct((n_layer, BP, DP), jnp.float32)),
        grid=(T,),
        in_specs=[
            pl.BlockSpec((1, BP, DP), lambda t: (t, 0, 0)),          # x[t]
            pl.BlockSpec((1, BP, OPP), lambda t: (t, 0, 0)),         # eps[t]
            pl.BlockSpec((n_layer, BP, DP), lambda t: (0, 0, 0)),    # h0
            pl.BlockSpec((n_layer, 2 * DP, 4 * DP), lambda t: (0, 0, 0)),  # W
            pl.BlockSpec((n_layer, 1, 4 * DP), lambda t: (0, 0, 0)),       # B
            pl.BlockSpec((DP, 2 * OPP), lambda t: (0, 0)),           # head W
            pl.BlockSpec((1, 2 * OPP), lambda t: (0, 0)),            # head b
        ],
        out_specs=(
            pl.BlockSpec((1, BP, 3 * OPP), lambda t: (t, 0, 0)),     # [z|mu|lv]
            pl.BlockSpec((n_layer, BP, DP), lambda t: (0, 0, 0)),    # final h
        ),
        scratch_shapes=[pltpu.VMEM((n_layer, BP, DP), jnp.float32)],
        compiler_params=pltpu.CompilerParams(
            dimension_semantics=("arbitrary",)),   # recurrence over T
    )(xp, ep, h0, W, Bb, WH, BH)

    z = y[:, :B, 0:out_dim]
    mu = y[:, :B, OPP:OPP + out_dim]
    logvar = y[:, :B, 2 * OPP:2 * OPP + out_dim]
    new_hidden = [hout[i, :B, :H] for i in range(n_layer)]
    if training:
        return (z, mu, logvar), new_hidden
    # eval mode of the torch module: return (mu, mu, logvar)
    return (mu, mu, logvar), new_hidden


# ----------------------------- reference (pure JAX) --------------------------
def _reference(x_seq, hidden, params, eps_seq):
    T = x_seq.shape[0]
    hid = [h for h in hidden]
    zs, mus, lvs = [], [], []
    for t in range(T):
        h = x_seq[t]
        for i in range(len(hid)):
            p = params["gru"][i]
            H = hid[i].shape[-1]
            gx = h @ p["w_ih"] + p["b_ih"]
            gh = hid[i] @ p["w_hh"] + p["b_hh"]
            r = jax.nn.sigmoid(gx[:, 0:H] + gh[:, 0:H])
            zg = jax.nn.sigmoid(gx[:, H:2 * H] + gh[:, H:2 * H])
            ng = jnp.tanh(gx[:, 2 * H:3 * H] + r * gh[:, 2 * H:3 * H])
            hid[i] = (1.0 - zg) * ng + zg * hid[i]
            h = hid[i]
        mu = h @ params["w_mu"] + params["b_mu"]
        lv = h @ params["w_lv"] + params["b_lv"]
        z = eps_seq[t] * jnp.exp(0.5 * lv) + mu
        zs.append(z); mus.append(mu); lvs.append(lv)
    return (jnp.stack(zs), jnp.stack(mus), jnp.stack(lvs)), hid


# ----------------------------- parameter init --------------------------------
def init_params(key, in_dim, out_dim, hidden_dim, n_layer):
    """Shapes mirror torch GRUCell / Linear, stored pre-transposed to (in, out);
    biases as (1, out).  Gate order [r, z, n]."""
    k = 1.0 / np.sqrt(hidden_dim)
    params = {"gru": []}
    keys = jax.random.split(key, 4 * n_layer + 4)
    ki = 0
    for i in range(n_layer):
        d_in = in_dim if i == 0 else hidden_dim
        w_ih = jax.random.uniform(keys[ki], (d_in, 3 * hidden_dim), jnp.float32, -k, k); ki += 1
        w_hh = jax.random.uniform(keys[ki], (hidden_dim, 3 * hidden_dim), jnp.float32, -k, k); ki += 1
        b_ih = jax.random.uniform(keys[ki], (1, 3 * hidden_dim), jnp.float32, -k, k); ki += 1
        b_hh = jax.random.uniform(keys[ki], (1, 3 * hidden_dim), jnp.float32, -k, k); ki += 1
        params["gru"].append(dict(w_ih=w_ih, w_hh=w_hh, b_ih=b_ih, b_hh=b_hh))
    params["w_mu"] = jax.random.uniform(keys[ki], (hidden_dim, out_dim), jnp.float32, -k, k); ki += 1
    params["b_mu"] = jax.random.uniform(keys[ki], (1, out_dim), jnp.float32, -k, k); ki += 1
    params["w_lv"] = jax.random.uniform(keys[ki], (hidden_dim, out_dim), jnp.float32, -k, k); ki += 1
    params["b_lv"] = jax.random.uniform(keys[ki], (1, out_dim), jnp.float32, -k, k); ki += 1
    return params


if __name__ == "__main__":
    T, B, IN_DIM, OUT_DIM, HIDDEN, N_LAYER = 8, 4, 16, 8, 32, 2

    key = jax.random.PRNGKey(0)
    k_param, k_x, k_eps = jax.random.split(key, 3)

    params = init_params(k_param, IN_DIM, OUT_DIM, HIDDEN, N_LAYER)
    x_seq = jax.random.normal(k_x, (T, B, IN_DIM), jnp.float32)
    # torch's reparameterize draws torch-RNG noise; here eps is an explicit
    # deterministic input so the kernel stays reproducible.
    eps_seq = jax.random.normal(k_eps, (T, B, OUT_DIM), jnp.float32)
    hidden = [jnp.zeros((B, HIDDEN), jnp.float32) for _ in range(N_LAYER)]

    (z, mu, logvar), new_hidden = gaussian_recurrent_cell(
        x_seq, hidden, params, eps_seq, training=True)
    jax.block_until_ready((z, mu, logvar, new_hidden))

    (z_ref, mu_ref, lv_ref), hid_ref = _reference(x_seq, hidden, params, eps_seq)
    np.testing.assert_allclose(np.asarray(mu), np.asarray(mu_ref), rtol=1e-4, atol=1e-4)
    np.testing.assert_allclose(np.asarray(logvar), np.asarray(lv_ref), rtol=1e-4, atol=1e-4)
    np.testing.assert_allclose(np.asarray(z), np.asarray(z_ref), rtol=1e-4, atol=1e-4)
    for a, b in zip(new_hidden, hid_ref):
        np.testing.assert_allclose(np.asarray(a), np.asarray(b), rtol=1e-4, atol=1e-4)

    print("KERNEL_OK")
</pallas_src>

<mosaic_0001>
module attributes {stable_mosaic.version = 11 : i64} {
  func.func @kernel(%arg0: i32, %arg1: memref<1x8x128xf32, #tpu.memory_space<vmem>>, %arg2: memref<1x8x128xf32, #tpu.memory_space<vmem>>, %arg3: memref<2x8x128xf32, #tpu.memory_space<vmem>>, %arg4: memref<2x256x512xf32, #tpu.memory_space<vmem>>, %arg5: memref<2x1x512xf32, #tpu.memory_space<vmem>>, %arg6: memref<128x256xf32, #tpu.memory_space<vmem>>, %arg7: memref<1x256xf32, #tpu.memory_space<vmem>>, %arg8: memref<1x8x384xf32, #tpu.memory_space<vmem>>, %arg9: memref<2x8x128xf32, #tpu.memory_space<vmem>>, %arg10: memref<2x8x128xf32, #tpu.memory_space<vmem>>) attributes {dimension_semantics = [#tpu.dimension_semantics<arbitrary>], iteration_bounds = array<i64: 8>, scalar_prefetch = 0 : i64, scratch_operands = 1 : i64, tpu.core_type = #tpu.core_type<tc>, window_params = [{transform_indices = @transform_0, window_bounds = array<i64: 1, 8, 128>}, {transform_indices = @transform_1, window_bounds = array<i64: 1, 8, 128>}, {pipeline_mode = #tpu.pipeline_mode<synchronous>, transform_indices = @transform_2, window_bounds = array<i64: 2, 8, 128>}, {pipeline_mode = #tpu.pipeline_mode<synchronous>, transform_indices = @transform_3, window_bounds = array<i64: 2, 256, 512>}, {pipeline_mode = #tpu.pipeline_mode<synchronous>, transform_indices = @transform_4, window_bounds = array<i64: 2, 1, 512>}, {pipeline_mode = #tpu.pipeline_mode<synchronous>, transform_indices = @transform_5, window_bounds = array<i64: 128, 256>}, {pipeline_mode = #tpu.pipeline_mode<synchronous>, transform_indices = @transform_6, window_bounds = array<i64: 1, 256>}, {transform_indices = @transform_7, window_bounds = array<i64: 1, 8, 384>}, {pipeline_mode = #tpu.pipeline_mode<synchronous>, transform_indices = @transform_8, window_bounds = array<i64: 2, 8, 128>}]} {
    %c0_i32 = arith.constant 0 : i32
    %0 = arith.cmpi eq, %arg0, %c0_i32 : i32
    %1 = arith.extui %0 : i1 to i32
    %c0_i32_0 = arith.constant 0 : i32
    %2 = arith.cmpi ne, %1, %c0_i32_0 : i32
    scf.if %2 {
      %c0_46 = arith.constant 0 : index
      %c0_47 = arith.constant 0 : index
      %c0_48 = arith.constant 0 : index
      %96 = vector.load %arg3[%c0_46, %c0_47, %c0_48] : memref<2x8x128xf32, #tpu.memory_space<vmem>>, vector<2x8x128xf32>
      %c0_49 = arith.constant 0 : index
      %c0_50 = arith.constant 0 : index
      %c0_51 = arith.constant 0 : index
      %97 = vector.load %arg10[%c0_49, %c0_50, %c0_51] : memref<2x8x128xf32, #tpu.memory_space<vmem>>, vector<2x8x128xf32>
      tpu.vector_store %arg10[%c0_49, %c0_50, %c0_51], %96 {strides = array<i32>} : memref<2x8x128xf32, #tpu.memory_space<vmem>>, vector<2x8x128xf32>,
    } else {
    }
    %c0 = arith.constant 0 : index
    %c0_1 = arith.constant 0 : index
    %c0_2 = arith.constant 0 : index
    %3 = vector.load %arg1[%c0, %c0_1, %c0_2] : memref<1x8x128xf32, #tpu.memory_space<vmem>>, vector<1x8x128xf32>
    %4 = vector.shape_cast %3 : vector<1x8x128xf32> to vector<8x128xf32>
    %c0_3 = arith.constant 0 : index
    %c0_4 = arith.constant 0 : index
    %c0_5 = arith.constant 0 : index
    %5 = vector.load %arg10[%c0_3, %c0_4, %c0_5] : memref<2x8x128xf32, #tpu.memory_space<vmem>>, vector<1x8x128xf32>
    %6 = vector.shape_cast %5 : vector<1x8x128xf32> to vector<8x128xf32>
    %7 = tpu.concatenate %4, %6 in 1 : vector<8x128xf32>, vector<8x128xf32> -> vector<8x256xf32>
    %c0_6 = arith.constant 0 : index
    %c0_7 = arith.constant 0 : index
    %c0_8 = arith.constant 0 : index
    %8 = vector.load %arg4[%c0_6, %c0_7, %c0_8] : memref<2x256x512xf32, #tpu.memory_space<vmem>>, vector<1x256x512xf32>
    %9 = vector.shape_cast %8 : vector<1x256x512xf32> to vector<256x512xf32>
    %cst = arith.constant dense<0.000000e+00> : vector<8x512xf32>
    %10 = tpu.matmul %7, %9, %cst {dimension_numbers = #tpu.dot_dimension_numbers<[1], [0], [0], [1], [0, 0, 1, 1], [], []>} : vector<8x256xf32>, vector<256x512xf32>, vector<8x512xf32> -> vector<8x512xf32>
    %c0_9 = arith.constant 0 : index
    %c0_10 = arith.constant 0 : index
    %c0_11 = arith.constant 0 : index
    %11 = vector.load %arg5[%c0_9, %c0_10, %c0_11] : memref<2x1x512xf32, #tpu.memory_space<vmem>>, vector<1x1x512xf32>
    %12 = vector.shape_cast %11 : vector<1x1x512xf32> to vector<1x512xf32>
    %13 = vector.broadcast %12 : vector<1x512xf32> to vector<8x512xf32>
    %14 = arith.addf %10, %13 : vector<8x512xf32>
    %15 = vector.extract_strided_slice %14 {offsets = [0, 0], sizes = [8, 128], strides = [1, 1]} : vector<8x512xf32> to vector<8x128xf32>
    %16 = arith.negf %15 : vector<8x128xf32>
    %17 = math.exp %16 : vector<8x128xf32>
    %cst_12 = arith.constant 1.000000e+00 : f32
    %18 = vector.broadcast %cst_12 : f32 to vector<8x128xf32>
    %19 = arith.addf %18, %17 : vector<8x128xf32>
    %20 = arith.divf %18, %19 : vector<8x128xf32>
    %21 = vector.extract_strided_slice %14 {offsets = [0, 128], sizes = [8, 128], strides = [1, 1]} : vector<8x512xf32> to vector<8x128xf32>
    %22 = arith.negf %21 : vector<8x128xf32>
    %23 = math.exp %22 : vector<8x128xf32>
    %cst_13 = arith.constant 1.000000e+00 : f32
    %24 = vector.broadcast %cst_13 : f32 to vector<8x128xf32>
    %25 = arith.addf %24, %23 : vector<8x128xf32>
    %26 = arith.divf %24, %25 : vector<8x128xf32>
    %27 = vector.extract_strided_slice %14 {offsets = [0, 256], sizes = [8, 128], strides = [1, 1]} : vector<8x512xf32> to vector<8x128xf32>
    %28 = vector.extract_strided_slice %14 {offsets = [0, 384], sizes = [8, 128], strides = [1, 1]} : vector<8x512xf32> to vector<8x128xf32>
    %29 = arith.mulf %20, %28 : vector<8x128xf32>
    %30 = arith.addf %27, %29 : vector<8x128xf32>
    %31 = math.tanh %30 : vector<8x128xf32>
    %cst_14 = arith.constant 1.000000e+00 : f32
    %32 = vector.broadcast %cst_14 : f32 to vector<8x128xf32>
    %33 = arith.subf %32, %26 : vector<8x128xf32>
    %34 = arith.mulf %33, %31 : vector<8x128xf32>
    %35 = arith.mulf %26, %6 : vector<8x128xf32>
    %36 = arith.addf %34, %35 : vector<8x128xf32>
    %c0_15 = arith.constant 0 : index
    %c0_16 = arith.constant 0 : index
    %c0_17 = arith.constant 0 : index
    %37 = vector.load %arg10[%c0_15, %c0_16, %c0_17] : memref<2x8x128xf32, #tpu.memory_space<vmem>>, vector<1x8x128xf32>
    %38 = vector.shape_cast %37 : vector<1x8x128xf32> to vector<8x128xf32>
    %39 = vector.shape_cast %36 : vector<8x128xf32> to vector<1x8x128xf32>
    tpu.vector_store %arg10[%c0_15, %c0_16, %c0_17], %39 {strides = array<i32>} : memref<2x8x128xf32, #tpu.memory_space<vmem>>, vector<1x8x128xf32>,
    %c1 = arith.constant 1 : index
    %c0_18 = arith.constant 0 : index
    %c0_19 = arith.constant 0 : index
    %40 = vector.load %arg10[%c1, %c0_18, %c0_19] : memref<2x8x128xf32, #tpu.memory_space<vmem>>, vector<1x8x128xf32>
    %41 = vector.shape_cast %40 : vector<1x8x128xf32> to vector<8x128xf32>
    %42 = tpu.concatenate %36, %41 in 1 : vector<8x128xf32>, vector<8x128xf32> -> vector<8x256xf32>
    %c1_20 = arith.constant 1 : index
    %c0_21 = arith.constant 0 : index
    %c0_22 = arith.constant 0 : index
    %43 = vector.load %arg4[%c1_20, %c0_21, %c0_22] : memref<2x256x512xf32, #tpu.memory_space<vmem>>, vector<1x256x512xf32>
    %44 = vector.shape_cast %43 : vector<1x256x512xf32> to vector<256x512xf32>
    %cst_23 = arith.constant dense<0.000000e+00> : vector<8x512xf32>
    %45 = tpu.matmul %42, %44, %cst_23 {dimension_numbers = #tpu.dot_dimension_numbers<[1], [0], [0], [1], [0, 0, 1, 1], [], []>} : vector<8x256xf32>, vector<256x512xf32>, vector<8x512xf32> -> vector<8x512xf32>
    %c1_24 = arith.constant 1 : index
    %c0_25 = arith.constant 0 : index
    %c0_26 = arith.constant 0 : index
    %46 = vector.load %arg5[%c1_24, %c0_25, %c0_26] : memref<2x1x512xf32, #tpu.memory_space<vmem>>, vector<1x1x512xf32>
    %47 = vector.shape_cast %46 : vector<1x1x512xf32> to vector<1x512xf32>
    %48 = vector.broadcast %47 : vector<1x512xf32> to vector<8x512xf32>
    %49 = arith.addf %45, %48 : vector<8x512xf32>
    %50 = vector.extract_strided_slice %49 {offsets = [0, 0], sizes = [8, 128], strides = [1, 1]} : vector<8x512xf32> to vector<8x128xf32>
    %51 = arith.negf %50 : vector<8x128xf32>
    %52 = math.exp %51 : vector<8x128xf32>
    %cst_27 = arith.constant 1.000000e+00 : f32
    %53 = vector.broadcast %cst_27 : f32 to vector<8x128xf32>
    %54 = arith.addf %53, %52 : vector<8x128xf32>
    %55 = arith.divf %53, %54 : vector<8x128xf32>
    %56 = vector.extract_strided_slice %49 {offsets = [0, 128], sizes = [8, 128], strides = [1, 1]} : vector<8x512xf32> to vector<8x128xf32>
    %57 = arith.negf %56 : vector<8x128xf32>
    %58 = math.exp %57 : vector<8x128xf32>
    %cst_28 = arith.constant 1.000000e+00 : f32
    %59 = vector.broadcast %cst_28 : f32 to vector<8x128xf32>
    %60 = arith.addf %59, %58 : vector<8x128xf32>
    %61 = arith.divf %59, %60 : vector<8x128xf32>
    %62 = vector.extract_strided_slice %49 {offsets = [0, 256], sizes = [8, 128], strides = [1, 1]} : vector<8x512xf32> to vector<8x128xf32>
    %63 = vector.extract_strided_slice %49 {offsets = [0, 384], sizes = [8, 128], strides = [1, 1]} : vector<8x512xf32> to vector<8x128xf32>
    %64 = arith.mulf %55, %63 : vector<8x128xf32>
    %65 = arith.addf %62, %64 : vector<8x128xf32>
    %66 = math.tanh %65 : vector<8x128xf32>
    %cst_29 = arith.constant 1.000000e+00 : f32
    %67 = vector.broadcast %cst_29 : f32 to vector<8x128xf32>
    %68 = arith.subf %67, %61 : vector<8x128xf32>
    %69 = arith.mulf %68, %66 : vector<8x128xf32>
    %70 = arith.mulf %61, %41 : vector<8x128xf32>
    %71 = arith.addf %69, %70 : vector<8x128xf32>
    %c1_30 = arith.constant 1 : index
    %c0_31 = arith.constant 0 : index
    %c0_32 = arith.constant 0 : index
    %72 = vector.load %arg10[%c1_30, %c0_31, %c0_32] : memref<2x8x128xf32, #tpu.memory_space<vmem>>, vector<1x8x128xf32>
    %73 = vector.shape_cast %72 : vector<1x8x128xf32> to vector<8x128xf32>
    %74 = vector.shape_cast %71 : vector<8x128xf32> to vector<1x8x128xf32>
    tpu.vector_store %arg10[%c1_30, %c0_31, %c0_32], %74 {strides = array<i32>} : memref<2x8x128xf32, #tpu.memory_space<vmem>>, vector<1x8x128xf32>,
    %c0_33 = arith.constant 0 : index
    %c0_34 = arith.constant 0 : index
    %75 = vector.load %arg6[%c0_33, %c0_34] : memref<128x256xf32, #tpu.memory_space<vmem>>, vector<128x256xf32>
    %cst_35 = arith.constant dense<0.000000e+00> : vector<8x256xf32>
    %76 = tpu.matmul %71, %75, %cst_35 {dimension_numbers = #tpu.dot_dimension_numbers<[1], [0], [0], [1], [0, 0, 1, 1], [], []>} : vector<8x128xf32>, vector<128x256xf32>, vector<8x256xf32> -> vector<8x256xf32>
    %c0_36 = arith.constant 0 : index
    %c0_37 = arith.constant 0 : index
    %77 = vector.load %arg7[%c0_36, %c0_37] : memref<1x256xf32, #tpu.memory_space<vmem>>, vector<1x256xf32>
    %78 = vector.broadcast %77 : vector<1x256xf32> to vector<8x256xf32>
    %79 = arith.addf %76, %78 : vector<8x256xf32>
    %80 = vector.extract_strided_slice %79 {offsets = [0, 0], sizes = [8, 128], strides = [1, 1]} : vector<8x256xf32> to vector<8x128xf32>
    %81 = vector.extract_strided_slice %79 {offsets = [0, 128], sizes = [8, 128], strides = [1, 1]} : vector<8x256xf32> to vector<8x128xf32>
    %c0_38 = arith.constant 0 : index
    %c0_39 = arith.constant 0 : index
    %c0_40 = arith.constant 0 : index
    %82 = vector.load %arg2[%c0_38, %c0_39, %c0_40] : memref<1x8x128xf32, #tpu.memory_space<vmem>>, vector<1x8x128xf32>
    %83 = vector.shape_cast %82 : vector<1x8x128xf32> to vector<8x128xf32>
    %cst_41 = arith.constant 5.000000e-01 : f32
    %84 = vector.broadcast %cst_41 : f32 to vector<8x128xf32>
    %85 = arith.mulf %84, %81 : vector<8x128xf32>
    %86 = math.exp %85 : vector<8x128xf32>
    %87 = arith.mulf %83, %86 : vector<8x128xf32>
    %88 = arith.addf %87, %80 : vector<8x128xf32>
    %89 = tpu.concatenate %88, %80, %81 in 1 : vector<8x128xf32>, vector<8x128xf32>, vector<8x128xf32> -> vector<8x384xf32>
    %c0_42 = arith.constant 0 : index
    %c0_43 = arith.constant 0 : index
    %c0_44 = arith.constant 0 : index
    %90 = vector.load %arg8[%c0_42, %c0_43, %c0_44] : memref<1x8x384xf32, #tpu.memory_space<vmem>>, vector<1x8x384xf32>
    %91 = vector.shape_cast %90 : vector<1x8x384xf32> to vector<8x384xf32>
    %92 = vector.shape_cast %89 : vector<8x384xf32> to vector<1x8x384xf32>
    tpu.vector_store %arg8[%c0_42, %c0_43, %c0_44], %92 {strides = array<i32>} : memref<1x8x384xf32, #tpu.memory_space<vmem>>, vector<1x8x384xf32>,
    %c7_i32 = arith.constant 7 : i32
    %93 = arith.cmpi eq, %arg0, %c7_i32 : i32
    %94 = arith.extui %93 : i1 to i32
    %c0_i32_45 = arith.constant 0 : i32
    %95 = arith.cmpi ne, %94, %c0_i32_45 : i32
    scf.if %95 {
      %c0_46 = arith.constant 0 : index
      %c0_47 = arith.constant 0 : index
      %c0_48 = arith.constant 0 : index
      %96 = vector.load %arg10[%c0_46, %c0_47, %c0_48] : memref<2x8x128xf32, #tpu.memory_space<vmem>>, vector<2x8x128xf32>
      %c0_49 = arith.constant 0 : index
      %c0_50 = arith.constant 0 : index
      %c0_51 = arith.constant 0 : index
      %97 = vector.load %arg9[%c0_49, %c0_50, %c0_51] : memref<2x8x128xf32, #tpu.memory_space<vmem>>, vector<2x8x128xf32>
      tpu.vector_store %arg9[%c0_49, %c0_50, %c0_51], %96 {strides = array<i32>} : memref<2x8x128xf32, #tpu.memory_space<vmem>>, vector<2x8x128xf32>,
    } else {
    }
    return
  }
  func.func @transform_0(%arg0: i32) -> (i32, i32, i32) {
    %c0_i32 = arith.constant 0 : i32
    %c0_i32_0 = arith.constant 0 : i32
    %c0_i32_1 = arith.constant 0 : i32
    return %arg0, %c0_i32, %c0_i32_0 : i32, i32, i32
  }
  func.func @transform_1(%arg0: i32) -> (i32, i32, i32) {
    %c0_i32 = arith.constant 0 : i32
    %c0_i32_0 = arith.constant 0 : i32
    %c0_i32_1 = arith.constant 0 : i32
    return %arg0, %c0_i32, %c0_i32_0 : i32, i32, i32
  }
  func.func @transform_2(%arg0: i32) -> (i32, i32, i32) {
    %c0_i32 = arith.constant 0 : i32
    %c0_i32_0 = arith.constant 0 : i32
    %c0_i32_1 = arith.constant 0 : i32
    %c0_i32_2 = arith.constant 0 : i32
    return %c0_i32, %c0_i32_0, %c0_i32_1 : i32, i32, i32
  }
  func.func @transform_3(%arg0: i32) -> (i32, i32, i32) {
    %c0_i32 = arith.constant 0 : i32
    %c0_i32_0 = arith.constant 0 : i32
    %c0_i32_1 = arith.constant 0 : i32
    %c0_i32_2 = arith.constant 0 : i32
    return %c0_i32, %c0_i32_0, %c0_i32_1 : i32, i32, i32
  }
  func.func @transform_4(%arg0: i32) -> (i32, i32, i32) {
    %c0_i32 = arith.constant 0 : i32
    %c0_i32_0 = arith.constant 0 : i32
    %c0_i32_1 = arith.constant 0 : i32
    %c0_i32_2 = arith.constant 0 : i32
    return %c0_i32, %c0_i32_0, %c0_i32_1 : i32, i32, i32
  }
  func.func @transform_5(%arg0: i32) -> (i32, i32) {
    %c0_i32 = arith.constant 0 : i32
    %c0_i32_0 = arith.constant 0 : i32
    %c0_i32_1 = arith.constant 0 : i32
    return %c0_i32, %c0_i32_0 : i32, i32
  }
  func.func @transform_6(%arg0: i32) -> (i32, i32) {
    %c0_i32 = arith.constant 0 : i32
    %c0_i32_0 = arith.constant 0 : i32
    %c0_i32_1 = arith.constant 0 : i32
    return %c0_i32, %c0_i32_0 : i32, i32
  }
  func.func @transform_7(%arg0: i32) -> (i32, i32, i32) {
    %c0_i32 = arith.constant 0 : i32
    %c0_i32_0 = arith.constant 0 : i32
    %c0_i32_1 = arith.constant 0 : i32
    return %arg0, %c0_i32, %c0_i32_0 : i32, i32, i32
  }
  func.func @transform_8(%arg0: i32) -> (i32, i32, i32) {
    %c0_i32 = arith.constant 0 : i32
    %c0_i32_0 = arith.constant 0 : i32
    %c0_i32_1 = arith.constant 0 : i32
    %c0_i32_2 = arith.constant 0 : i32
    return %c0_i32, %c0_i32_0, %c0_i32_1 : i32, i32, i32
  }
}

</mosaic_0001>

<llo_original>
// kernel: tpu_custom_call.1
$region0: #{tpu_custom_call.1}
  #allocation0 [shape = 'u32[]', space=smem, size = 0x4, offset = 0x4, fixed_abs, tag = 'smem constant byte address 0x4 - core index']
  #allocation1 [shape = 'u32[144,128]{1,0:T(1,128)}', space=vmem, size = 0x12000, scoped, tag = 'internal scratch']
  #allocation2 [shape = 'f32[2,8,128]{2,1,0:T(8,128)}', space=vmem, size = 0x2000, scoped, tag = 'scratch operand']
  %s0 = inlined_call_operand.hbm [shape: f32[8,8,128], index: 0, kind: input, shape index: {}]
  %s1 = inlined_call_operand.hbm [shape: f32[8,8,128], index: 1, kind: input, shape index: {}]
  %s2 = inlined_call_operand.hbm [shape: f32[2,8,128], index: 2, kind: input, shape index: {}]
  %s3 = inlined_call_operand.hbm [shape: f32[2,256,512], index: 3, kind: input, shape index: {}]
  %s4 = inlined_call_operand.vmem [shape: f32[2,1,512], index: 4, kind: input, shape index: {}]
  %s5 = inlined_call_operand.hbm [shape: f32[128,256], index: 5, kind: input, shape index: {}]
  %s6 = inlined_call_operand.vmem [shape: f32[1,256], index: 6, kind: input, shape index: {}]
  %s7 = inlined_call_operand.hbm [shape: f32[8,8,384], index: 7, kind: output, shape index: {0}]
  %s8 = inlined_call_operand.hbm [shape: f32[2,8,128], index: 8, kind: output, shape index: {1}]
  %9 = xla_tuple %s7, %s8
  %s10 = sld [smem:[#allocation0]]
  $region97: #{tpu_custom_call.1} parent=0
    _
  %s12 = ssub.s32 1, %s10
  %s13 = scalar_select 0, %s12, %s10
  $region1: #{tpu_custom_call.1} parent=0
    #allocation3 [shape = 'u8[8192]{0}', space=vmem, size = 0x2000, scoped, tag = 'input window, operand 0']
    #allocation4 [shape = 's32[2]{0}', space=sflag, size = 0x8, scoped, tag = 'scoped memory for tpu_custom_call.1']
    #allocation5 [shape = 's32[2]{0}', space=sflag, size = 0x8, scoped, tag = 'scoped memory for tpu_custom_call.1']
    #allocation6 [shape = 'u8[8192]{0}', space=vmem, size = 0x2000, scoped, tag = 'input window, operand 1']
    #allocation7 [shape = 's32[2]{0}', space=sflag, size = 0x8, scoped, tag = 'scoped memory for tpu_custom_call.1']
    #allocation8 [shape = 'u8[8192]{0}', space=vmem, size = 0x2000, scoped, tag = 'input window, operand 2, single buffered']
    #allocation9 [shape = 'u8[1048576]{0}', space=vmem, size = 0x100000, scoped, tag = 'input window, operand 3, single buffered']
    #allocation10 [shape = 's32[1]{0}', space=sflag, size = 0x4, scoped, tag = 'scoped memory for tpu_custom_call.1']
    #allocation11 [shape = 'u8[131072]{0}', space=vmem, size = 0x20000, scoped, tag = 'input window, operand 5, single buffered']
    #allocation12 [shape = 'u8[24576]{0}', space=vmem, size = 0x6000, scoped, tag = 'output window, operand 0']
    #allocation13 [shape = 'u8[8192]{0}', space=vmem, size = 0x2000, scoped, tag = 'output window, operand 1, single buffered']
    #allocation14 [shape = 's32[1]{0}', space=sflag, size = 0x4, scoped, tag = 'scoped memory for tpu_custom_call.1']
    %14 = vsyncpa [#allocation4], 0
    %s15 = scalar_lea.sflag [#allocation4], 1
    %16 = vsyncpa %s15, 0
    %17 = vsyncpa [#allocation7], 0
    %s18 = scalar_lea.sflag [#allocation7], 1
    %19 = vsyncpa %s18, 0
    %20 = vsyncpa [#allocation10], 0
    %21 = vsyncpa [#allocation5], 0
    %s22 = scalar_lea.sflag [#allocation5], 1
    %23 = vsyncpa %s22, 0
    %24 = vsyncpa [#allocation14], 0
    loop: start=0, step=1, limit=10
    $region2: #{tpu_custom_call.1} parent=1 // loop_pre_header
      _
    $region3: #{tpu_custom_call.1} parent=1 // loop_header
      %s26 = sphi 0, %s30
      %p27 = scmp.ge.s32.totalorder %s26, 10
      %s36 = sphi 0, %s38
      %s39 = sphi 0, %s36
      %s40 = sphi 0, %s39
      %s56 = sphi 0, %s40
      %s62 = sphi 0, %s64
      %s65 = sphi 0, %s62
      %s66 = sphi 0, %s65
      %s82 = sphi 0, %s66
      %s86 = sphi 0, %s86
      %s88 = sphi 0, %s86
      %s89 = sphi 0, %s88
      %s103 = sphi 0, %s89
      %s107 = sphi 0, %s107
      %s109 = sphi 0, %s107
      %s110 = sphi 0, %s109
      %s124 = sphi 0, %s110
      %s128 = sphi 0, %s128
      %s130 = sphi 0, %s128
      %s131 = sphi 0, %s130
      %s145 = sphi 0, %s131
      %s149 = sphi 0, %s149
      %s151 = sphi 0, %s149
      %s152 = sphi 0, %s151
      %s166 = sphi 0, %s152
      %s170 = sphi 0, %s170
      %s172 = sphi 0, %s170
      %s173 = sphi 0, %s172
      %s187 = sphi 0, %s173
      %s193 = sphi 0, %s195
      %s196 = sphi 0, %s193
      %s197 = sphi 0, %s196
      %s213 = sphi 0, %s197
      %s217 = sphi 0, %s217
      %s219 = sphi 0, %s217
      %s220 = sphi 0, %s219
      %s234 = sphi 0, %s220
    $region4: #{tpu_custom_call.1} parent=1 // loop_header_branch
      %29 = sbr.rel (%p27) target = $region8
    $region5: #{tpu_custom_call.1} parent=1 // loop_body
      %s31 = ssub.s32 %s26, 1
      %s32 = ssub.s32 %s26, 2
      %s33 = sadd.s32 %s26, 1
      %s34 = ssub.s32 %s26, %s33
      %p35 = scmp.eq.s32.totalorder %s34, 0
      %s37 = sadd.s32 %s36, 1
      %s38 = scalar_select %p35, %s36, %s37
      %p41 = pneg %p35
      %p42 = scmp.eq.s32.totalorder %s26, 7
      %p43 = por %p41, %p42
      %p44 = scmp.ne.s32.totalorder %s36, %s39
      %p45 = scmp.eq.s32.totalorder %s26, 0
      %p46 = por %p44, %p45
      %p47 = scmp.ne.s32.totalorder %s36, %s39
      %p48 = scmp.eq.s32.totalorder %s31, 7
      %p49 = por %p47, %p48
      %p50 = scmp.ne.s32.totalorder %s39, %s40
      %p51 = scmp.eq.s32.totalorder %s31, 0
      %p52 = por %p50, %p51
      %p53 = scmp.ne.s32.totalorder %s39, %s40
      %p54 = scmp.eq.s32.totalorder %s32, 7
      %p55 = por %p53, %p54
      %p57 = scmp.ne.s32.totalorder %s40, %s56
      %p58 = scmp.eq.s32.totalorder %s32, 0
      %p59 = por %p57, %p58
      %s60 = ssub.s32 %s26, %s33
      %p61 = scmp.eq.s32.totalorder %s60, 0
      %s63 = sadd.s32 %s62, 1
      %s64 = scalar_select %p61, %s62, %s63
      %p67 = pneg %p61
      %p68 = scmp.eq.s32.totalorder %s26, 7
      %p69 = por %p67, %p68
      %p70 = scmp.ne.s32.totalorder %s62, %s65
      %p71 = scmp.eq.s32.totalorder %s26, 0
      %p72 = por %p70, %p71
      %p73 = scmp.ne.s32.totalorder %s62, %s65
      %p74 = scmp.eq.s32.totalorder %s31, 7
      %p75 = por %p73, %p74
      %p76 = scmp.ne.s32.totalorder %s65, %s66
      %p77 = scmp.eq.s32.totalorder %s31, 0
      %p78 = por %p76, %p77
      %p79 = scmp.ne.s32.totalorder %s65, %s66
      %p80 = scmp.eq.s32.totalorder %s32, 7
      %p81 = por %p79, %p80
      %p83 = scmp.ne.s32.totalorder %s66, %s82
      %p84 = scmp.eq.s32.totalorder %s32, 0
      %p85 = por %p83, %p84
      %s87 = sadd.s32 %s86, 1
      %p90 = scmp.eq.s32.totalorder %s26, 7
      %p91 = scmp.ne.s32.totalorder %s86, %s88
      %p92 = scmp.eq.s32.totalorder %s26, 0
      %p93 = por %p91, %p92
      %p94 = scmp.ne.s32.totalorder %s86, %s88
      %p95 = scmp.eq.s32.totalorder %s31, 7
      %p96 = por %p94, %p95
      %p97 = scmp.ne.s32.totalorder %s88, %s89
      %p98 = scmp.eq.s32.totalorder %s31, 0
      %p99 = por %p97, %p98
      %p100 = scmp.ne.s32.totalorder %s88, %s89
      %p101 = scmp.eq.s32.totalorder %s32, 7
      %p102 = por %p100, %p101
      %p104 = scmp.ne.s32.totalorder %s89, %s103
      %p105 = scmp.eq.s32.totalorder %s32, 0
      %p106 = por %p104, %p105
      %s108 = sadd.s32 %s107, 1
      %p111 = scmp.eq.s32.totalorder %s26, 7
      %p112 = scmp.ne.s32.totalorder %s107, %s109
      %p113 = scmp.eq.s32.totalorder %s26, 0
      %p114 = por %p112, %p113
      %p115 = scmp.ne.s32.totalorder %s107, %s109
      %p116 = scmp.eq.s32.totalorder %s31, 7
      %p117 = por %p115, %p116
      %p118 = scmp.ne.s32.totalorder %s109, %s110
      %p119 = scmp.eq.s32.totalorder %s31, 0
      %p120 = por %p118, %p119
      %p121 = scmp.ne.s32.totalorder %s109, %s110
      %p122 = scmp.eq.s32.totalorder %s32, 7
      %p123 = por %p121, %p122
      %p125 = scmp.ne.s32.totalorder %s110, %s124
      %p126 = scmp.eq.s32.totalorder %s32, 0
      %p127 = por %p125, %p126
      %s129 = sadd.s32 %s128, 1
      %p132 = scmp.eq.s32.totalorder %s26, 7
      %p133 = scmp.ne.s32.totalorder %s128, %s130
      %p134 = scmp.eq.s32.totalorder %s26, 0
      %p135 = por %p133, %p134
      %p136 = scmp.ne.s32.totalorder %s128, %s130
      %p137 = scmp.eq.s32.totalorder %s31, 7
      %p138 = por %p136, %p137
      %p139 = scmp.ne.s32.totalorder %s130, %s131
      %p140 = scmp.eq.s32.totalorder %s31, 0
      %p141 = por %p139, %p140
      %p142 = scmp.ne.s32.totalorder %s130, %s131
      %p143 = scmp.eq.s32.totalorder %s32, 7
      %p144 = por %p142, %p143
      %p146 = scmp.ne.s32.totalorder %s131, %s145
      %p147 = scmp.eq.s32.totalorder %s32, 0
      %p148 = por %p146, %p147
      %s150 = sadd.s32 %s149, 1
      %p153 = scmp.eq.s32.totalorder %s26, 7
      %p154 = scmp.ne.s32.totalorder %s149, %s151
      %p155 = scmp.eq.s32.totalorder %s26, 0
      %p156 = por %p154, %p155
      %p157 = scmp.ne.s32.totalorder %s149, %s151
      %p158 = scmp.eq.s32.totalorder %s31, 7
      %p159 = por %p157, %p158
      %p160 = scmp.ne.s32.totalorder %s151, %s152
      %p161 = scmp.eq.s32.totalorder %s31, 0
      %p162 = por %p160, %p161
      %p163 = scmp.ne.s32.totalorder %s151, %s152
      %p164 = scmp.eq.s32.totalorder %s32, 7
      %p165 = por %p163, %p164
      %p167 = scmp.ne.s32.totalorder %s152, %s166
      %p168 = scmp.eq.s32.totalorder %s32, 0
      %p169 = por %p167, %p168
      %s171 = sadd.s32 %s170, 1
      %p174 = scmp.eq.s32.totalorder %s26, 7
      %p175 = scmp.ne.s32.totalorder %s170, %s172
      %p176 = scmp.eq.s32.totalorder %s26, 0
      %p177 = por %p175, %p176
      %p178 = scmp.ne.s32.totalorder %s170, %s172
      %p179 = scmp.eq.s32.totalorder %s31, 7
      %p180 = por %p178, %p179
      %p181 = scmp.ne.s32.totalorder %s172, %s173
      %p182 = scmp.eq.s32.totalorder %s31, 0
      %p183 = por %p181, %p182
      %p184 = scmp.ne.s32.totalorder %s172, %s173
      %p185 = scmp.eq.s32.totalorder %s32, 7
      %p186 = por %p184, %p185
      %p188 = scmp.ne.s32.totalorder %s173, %s187
      %p189 = scmp.eq.s32.totalorder %s32, 0
      %p190 = por %p188, %p189
      %s191 = ssub.s32 %s26, %s33
      %p192 = scmp.eq.s32.totalorder %s191, 0
      %s194 = sadd.s32 %s193, 1
      %s195 = scalar_select %p192, %s193, %s194
      %p198 = pneg %p192
      %p199 = scmp.eq.s32.totalorder %s26, 7
      %p200 = por %p198, %p199
      %p201 = scmp.ne.s32.totalorder %s193, %s196
      %p202 = scmp.eq.s32.totalorder %s26, 0
      %p203 = por %p201, %p202
      %p204 = scmp.ne.s32.totalorder %s193, %s196
      %p205 = scmp.eq.s32.totalorder %s31, 7
      %p206 = por %p204, %p205
      %p207 = scmp.ne.s32.totalorder %s196, %s197
      %p208 = scmp.eq.s32.totalorder %s31, 0
      %p209 = por %p207, %p208
      %p210 = scmp.ne.s32.totalorder %s196, %s197
      %p211 = scmp.eq.s32.totalorder %s32, 7
      %p212 = por %p210, %p211
      %p214 = scmp.ne.s32.totalorder %s197, %s213
      %p215 = scmp.eq.s32.totalorder %s32, 0
      %p216 = por %p214, %p215
      %s218 = sadd.s32 %s217, 1
      %p221 = scmp.eq.s32.totalorder %s26, 7
      %p222 = scmp.ne.s32.totalorder %s217, %s219
      %p223 = scmp.eq.s32.totalorder %s26, 0
      %p224 = por %p222, %p223
      %p225 = scmp.ne.s32.totalorder %s217, %s219
      %p226 = scmp.eq.s32.totalorder %s31, 7
      %p227 = por %p225, %p226
      %p228 = scmp.ne.s32.totalorder %s219, %s220
      %p229 = scmp.eq.s32.totalorder %s31, 0
      %p230 = por %p228, %p229
      %p231 = scmp.ne.s32.totalorder %s219, %s220
      %p232 = scmp.eq.s32.totalorder %s32, 7
      %p233 = por %p231, %p232
      %p235 = scmp.ne.s32.totalorder %s220, %s234
      %p236 = scmp.eq.s32.totalorder %s32, 0
      %p237 = por %p235, %p236
      %p238 = scmp.le.s32.totalorder 1, %s26
      %p239 = scmp.lt.s32.totalorder %s26, 9
      %p240 = pnand %p238, %p239
      %p241 = pneg %p240
      // Predicated region
      $region9: #{tpu_custom_call.1} parent=5 // pred_check
        _
      $region10: #{tpu_custom_call.1} parent=5 // pred_check_branch
        %243 = sbr.rel (%p240) target = $region12
      $region11: #{tpu_custom_call.1} parent=5 // pred_region
        %s244 = ssub.s32 %s26, 1
        // Predicated region
        $region13: #{tpu_custom_call.1} parent=11 // pred_check
          %p245 = pneg %p99
        $region14: #{tpu_custom_call.1} parent=11 // pred_check_branch
          %247 = sbr.rel (%p245) target = $region16
        $region15: #{tpu_custom_call.1} parent=11 // pred_region
          %s249 = ssub.s32 256, 256
          %250 = vsyncadd [#allocation7], %s249
          %s251 = sshll.u32 [#allocation8], 4
          %s252 = int_to_ptr.vmem [resolvable:$true] %s251
          %257 = dma.hbm_to_vmem [thread:$0]  %s2, 256, %s252, [#allocation7], 128, 128, 8
        $region16: #{tpu_custom_call.1} parent=11 // pred_fallthru
          _
        // Predicated region
        $region17: #{tpu_custom_call.1} parent=11 // pred_check
          %p258 = pneg %p120
        $region18: #{tpu_custom_call.1} parent=11 // pred_check_branch
          %260 = sbr.rel (%p258) target = $region20
        $region19: #{tpu_custom_call.1} parent=11 // pred_region
          %s262 = ssub.s32 32768, 32768
          %263 = vsyncadd [#allocation10], %s262
          %s264 = sshll.u32 [#allocation9], 4
          %s265 = int_to_ptr.vmem [resolvable:$true] %s264
          %270 = dma.hbm_to_vmem [thread:$0]  %s3, 32768, %s265, [#allocation10], 512, 512, 32
        $region20: #{tpu_custom_call.1} parent=11 // pred_fallthru
          _
        // Predicated region
        $region21: #{tpu_custom_call.1} parent=11 // pred_check
          %p271 = pneg %p141
        $region22: #{tpu_custom_call.1} parent=11 // pred_check_branch
          %273 = sbr.rel (%p271) target = $region24
        $region23: #{tpu_custom_call.1} parent=11 // pred_region
          _
        $region24: #{tpu_custom_call.1} parent=11 // pred_fallthru
          _
        // Predicated region
        $region25: #{tpu_custom_call.1} parent=11 // pred_check
          %p274 = pneg %p162
        $region26: #{tpu_custom_call.1} parent=11 // pred_check_branch
          %276 = sbr.rel (%p274) target = $region28
        $region27: #{tpu_custom_call.1} parent=11 // pred_region
          %s278 = ssub.s32 4096, 4096
          %279 = vsyncadd [#allocation10], %s278
          %s280 = sshll.u32 [#allocation11], 4
          %s281 = int_to_ptr.vmem [resolvable:$true] %s280
          %286 = dma.hbm_to_vmem [thread:$0]  %s5, 4096, %s281, [#allocation10], 256, 256, 16
        $region28: #{tpu_custom_call.1} parent=11 // pred_fallthru
          _
        // Predicated region
        $region29: #{tpu_custom_call.1} parent=11 // pred_check
          %p287 = pneg %p183
        $region30: #{tpu_custom_call.1} parent=11 // pred_check_branch
          %289 = sbr.rel (%p287) target = $region32
        $region31: #{tpu_custom_call.1} parent=11 // pred_region
          _
        $region32: #{tpu_custom_call.1} parent=11 // pred_fallthru
          _
      $region12: #{tpu_custom_call.1} parent=5 // pred_fallthru
        _
      %p290 = scmp.lt.s32.totalorder %s26, 8
      // Predicated region
      $region33: #{tpu_custom_call.1} parent=5 // pred_check
        %p291 = pneg %p290
      $region34: #{tpu_custom_call.1} parent=5 // pred_check_branch
        %293 = sbr.rel (%p291) target = $region36
      $region35: #{tpu_custom_call.1} parent=5 // pred_region
        // Predicated region
        $region37: #{tpu_custom_call.1} parent=35 // pred_check
          %p294 = pneg %p46
        $region38: #{tpu_custom_call.1} parent=35 // pred_check_branch
          %296 = sbr.rel (%p294) target = $region40
        $region39: #{tpu_custom_call.1} parent=35 // pred_region
          %s297 = sand.u32 %s36, 1
          %s298 = scalar_lea.sflag [#allocation4], %s297
          %s299 = sand.u32 %s36, 1
          %s300 = smul.addr %s299, 8
          %s301 = scalar_lea.vmem [#allocation3], %s300
          %s303 = ssub.s32 128, 128
          %304 = vsyncadd %s298, %s303
          %s305 = smul.addr %s26, 128
          %s306 = scalar_lea.hbm %s0, %s305
          %s308 = sshll.u32 %s301, 4
          %s309 = int_to_ptr.vmem [resolvable:$true] %s308
          %311 = dma.hbm_to_vmem [thread:$0]  %s306, 128, %s309, %s298
        $region40: #{tpu_custom_call.1} parent=35 // pred_fallthru
          _
        // Predicated region
        $region41: #{tpu_custom_call.1} parent=35 // pred_check
          %p312 = pneg %p72
        $region42: #{tpu_custom_call.1} parent=35 // pred_check_branch
          %314 = sbr.rel (%p312) target = $region44
        $region43: #{tpu_custom_call.1} parent=35 // pred_region
          %s315 = sand.u32 %s26, 1
          %s316 = scalar_lea.sflag [#allocation7], %s315
          %s317 = sand.u32 %s62, 1
          %s318 = smul.addr %s317, 8
          %s319 = scalar_lea.vmem [#allocation6], %s318
          %s321 = ssub.s32 128, 128
          %322 = vsyncadd %s316, %s321
          %s323 = smul.addr %s26, 128
          %s324 = scalar_lea.hbm %s1, %s323
          %s326 = sshll.u32 %s319, 4
          %s327 = int_to_ptr.vmem [resolvable:$true] %s326
          %329 = dma.hbm_to_vmem [thread:$0]  %s324, 128, %s327, %s316
        $region44: #{tpu_custom_call.1} parent=35 // pred_fallthru
          _
      $region36: #{tpu_custom_call.1} parent=5 // pred_fallthru
        _
      %p330 = scmp.le.s32.totalorder 1, %s26
      %p331 = scmp.lt.s32.totalorder %s26, 9
      %p332 = pnand %p330, %p331
      %p333 = pneg %p332
      // Predicated region
      $region45: #{tpu_custom_call.1} parent=5 // pred_check
        _
      $region46: #{tpu_custom_call.1} parent=5 // pred_check_branch
        %335 = sbr.rel (%p332) target = $region48
      $region47: #{tpu_custom_call.1} parent=5 // pred_region
        %s336 = ssub.s32 %s26, 1
        %s337 = sand.u32 %s39, 1
        %s338 = scalar_lea.sflag [#allocation4], %s337
        %s339 = sand.u32 %s39, 1
        %s340 = smul.addr %s339, 8
        %s341 = scalar_lea.vmem [#allocation3], %s340
        // Predicated region
        $region49: #{tpu_custom_call.1} parent=47 // pred_check
          %p342 = pneg %p52
        $region50: #{tpu_custom_call.1} parent=47 // pred_check_branch
          %344 = sbr.rel (%p342) target = $region52
        $region51: #{tpu_custom_call.1} parent=47 // pred_region
          %345 = dma.done %s338, 128
        $region52: #{tpu_custom_call.1} parent=47 // pred_fallthru
          _
        %s346 = sand.u32 %s31, 1
        %s347 = scalar_lea.sflag [#allocation7], %s346
        %s348 = sand.u32 %s65, 1
        %s349 = smul.addr %s348, 8
        %s350 = scalar_lea.vmem [#allocation6], %s349
        // Predicated region
        $region53: #{tpu_custom_call.1} parent=47 // pred_check
          %p351 = pneg %p78
        $region54: #{tpu_custom_call.1} parent=47 // pred_check_branch
          %353 = sbr.rel (%p351) target = $region56
        $region55: #{tpu_custom_call.1} parent=47 // pred_region
          %354 = dma.done %s347, 128
        $region56: #{tpu_custom_call.1} parent=47 // pred_fallthru
          _
        // Predicated region
        $region57: #{tpu_custom_call.1} parent=47 // pred_check
          %p355 = pneg %p99
        $region58: #{tpu_custom_call.1} parent=47 // pred_check_branch
          %357 = sbr.rel (%p355) target = $region60
        $region59: #{tpu_custom_call.1} parent=47 // pred_region
          %358 = dma.done [#allocation7], 256
        $region60: #{tpu_custom_call.1} parent=47 // pred_fallthru
          _
        // Predicated region
        $region61: #{tpu_custom_call.1} parent=47 // pred_check
          %p359 = pneg %p120
        $region62: #{tpu_custom_call.1} parent=47 // pred_check_branch
          %361 = sbr.rel (%p359) target = $region64
        $region63: #{tpu_custom_call.1} parent=47 // pred_region
          %362 = dma.done [#allocation10], 32768
        $region64: #{tpu_custom_call.1} parent=47 // pred_fallthru
          _
        // Predicated region
        $region65: #{tpu_custom_call.1} parent=47 // pred_check
          %p363 = pneg %p162
        $region66: #{tpu_custom_call.1} parent=47 // pred_check_branch
          %365 = sbr.rel (%p363) target = $region68
        $region67: #{tpu_custom_call.1} parent=47 // pred_region
          %366 = dma.done [#allocation10], 4096
        $region68: #{tpu_custom_call.1} parent=47 // pred_fallthru
          _
        %s367 = sand.u32 %s39, 1
        %s368 = scalar_lea.sflag [#allocation4], %s367
        %s369 = sand.u32 %s39, 1
        %s370 = smul.addr %s369, 8
        %s371 = scalar_lea.vmem [#allocation3], %s370
        %p372 = pneg %p52
        %p373 = pneg %p49
        %s374 = sand.u32 %s31, 1
        %s375 = scalar_lea.sflag [#allocation7], %s374
        %s376 = sand.u32 %s65, 1
        %s377 = smul.addr %s376, 8
        %s378 = scalar_lea.vmem [#allocation6], %s377
        %p379 = pneg %p78
        %p380 = pneg %p75
        %p381 = pneg %p99
        %p382 = pneg %p96
        %p383 = pneg %p120
        %p384 = pneg %p117
        %p385 = pneg %p141
        %p386 = pneg %p138
        %p387 = pneg %p162
        %p388 = pneg %p159
        %p389 = pneg %p183
        %p390 = pneg %p180
        %p391 = pneg %p209
        %p392 = pneg %p206
        %s393 = sand.u32 %s196, 1
        %s394 = scalar_lea.sflag [#allocation5], %s393
        %s395 = sand.u32 %s196, 1
        %s396 = smul.addr %s395, 24
        %s397 = scalar_lea.vmem [#allocation12], %s396
        %p398 = pneg %p230
        %p399 = pneg %p227
        %p400 = scmp.eq.s32.totalorder %s31, 0
        // Predicated region
        $region69: #{tpu_custom_call.1} parent=47 // pred_check
          %p401 = pneg %p400
        $region70: #{tpu_custom_call.1} parent=47 // pred_check_branch
          %403 = sbr.rel (%p401) target = $region72
        $region71: #{tpu_custom_call.1} parent=47 // pred_region
          %v404 = vld [vmem:[#allocation8] sm:$0xff]
          %v405 = vld [vmem:[#allocation8 + $0x8] sm:$0xff]
          %406 = vst [vmem:[#allocation2] sm:$0xff] %v404
          %407 = vst [vmem:[#allocation2 + $0x8] sm:$0xff] %v405
        $region72: #{tpu_custom_call.1} parent=47 // pred_fallthru
          _
        %v408 = vld [vmem:[%s341] sm:$0xff]
        %v409 = vld [vmem:[#allocation2] sm:$0xff]
        %v410 = vld [vmem:[#allocation9] sm:$0xff]
        %v411 = vld [vmem:[#allocation9 + $0x8] sm:$0xff]
        %v412 = vld [vmem:[#allocation9 + $0x10] sm:$0xff]
        %v413 = vld [vmem:[#allocation9 + $0x18] sm:$0xff]
        %v414 = vld [vmem:[#allocation9 + $0x20] sm:$0xff]
        %v415 = vld [vmem:[#allocation9 + $0x28] sm:$0xff]
        %v416 = vld [vmem:[#allocation9 + $0x30] sm:$0xff]
        %v417 = vld [vmem:[#allocation9 + $0x38] sm:$0xff]
        %v418 = vld [vmem:[#allocation9 + $0x40] sm:$0xff]
        %v419 = vld [vmem:[#allocation9 + $0x48] sm:$0xff]
        %v420 = vld [vmem:[#allocation9 + $0x50] sm:$0xff]
        %v421 = vld [vmem:[#allocation9 + $0x58] sm:$0xff]
        %v422 = vld [vmem:[#allocation9 + $0x60] sm:$0xff]
        %v423 = vld [vmem:[#allocation9 + $0x68] sm:$0xff]
        %v424 = vld [vmem:[#allocation9 + $0x70] sm:$0xff]
        %v425 = vld [vmem:[#allocation9 + $0x78] sm:$0xff]
        %v426 = vld [vmem:[#allocation9 + $0x80] sm:$0xff]
        %v427 = vld [vmem:[#allocation9 + $0x88] sm:$0xff]
        %v428 = vld [vmem:[#allocation9 + $0x90] sm:$0xff]
        %v429 = vld [vmem:[#allocation9 + $0x98] sm:$0xff]
        %v430 = vld [vmem:[#allocation9 + $0xa0] sm:$0xff]
        %v431 = vld [vmem:[#allocation9 + $0xa8] sm:$0xff]
        %v432 = vld [vmem:[#allocation9 + $0xb0] sm:$0xff]
        %v433 = vld [vmem:[#allocation9 + $0xb8] sm:$0xff]
        %v434 = vld [vmem:[#allocation9 + $0xc0] sm:$0xff]
        %v435 = vld [vmem:[#allocation9 + $0xc8] sm:$0xff]
        %v436 = vld [vmem:[#allocation9 + $0xd0] sm:$0xff]
        %v437 = vld [vmem:[#allocation9 + $0xd8] sm:$0xff]
        %v438 = vld [vmem:[#allocation9 + $0xe0] sm:$0xff]
        %v439 = vld [vmem:[#allocation9 + $0xe8] sm:$0xff]
        %v440 = vld [vmem:[#allocation9 + $0xf0] sm:$0xff]
        %v441 = vld [vmem:[#allocation9 + $0xf8] sm:$0xff]
        %v442 = vld [vmem:[#allocation9 + $0x100] sm:$0xff]
        %v443 = vld [vmem:[#allocation9 + $0x108] sm:$0xff]
        %v444 = vld [vmem:[#allocation9 + $0x110] sm:$0xff]
        %v445 = vld [vmem:[#allocation9 + $0x118] sm:$0xff]
        %v446 = vld [vmem:[#allocation9 + $0x120] sm:$0xff]
        %v447 = vld [vmem:[#allocation9 + $0x128] sm:$0xff]
        %v448 = vld [vmem:[#allocation9 + $0x130] sm:$0xff]
        %v449 = vld [vmem:[#allocation9 + $0x138] sm:$0xff]
        %v450 = vld [vmem:[#allocation9 + $0x140] sm:$0xff]
        %v451 = vld [vmem:[#allocation9 + $0x148] sm:$0xff]
        %v452 = vld [vmem:[#allocation9 + $0x150] sm:$0xff]
        %v453 = vld [vmem:[#allocation9 + $0x158] sm:$0xff]
        %v454 = vld [vmem:[#allocation9 + $0x160] sm:$0xff]
        %v455 = vld [vmem:[#allocation9 + $0x168] sm:$0xff]
        %v456 = vld [vmem:[#allocation9 + $0x170] sm:$0xff]
        %v457 = vld [vmem:[#allocation9 + $0x178] sm:$0xff]
        %v458 = vld [vmem:[#allocation9 + $0x180] sm:$0xff]
        %v459 = vld [vmem:[#allocation9 + $0x188] sm:$0xff]
        %v460 = vld [vmem:[#allocation9 + $0x190] sm:$0xff]
        %v461 = vld [vmem:[#allocation9 + $0x198] sm:$0xff]
        %v462 = vld [vmem:[#allocation9 + $0x1a0] sm:$0xff]
        %v463 = vld [vmem:[#allocation9 + $0x1a8] sm:$0xff]
        %v464 = vld [vmem:[#allocation9 + $0x1b0] sm:$0xff]
        %v465 = vld [vmem:[#allocation9 + $0x1b8] sm:$0xff]
        %v466 = vld [vmem:[#allocation9 + $0x1c0] sm:$0xff]
        %v467 = vld [vmem:[#allocation9 + $0x1c8] sm:$0xff]
        %v468 = vld [vmem:[#allocation9 + $0x1d0] sm:$0xff]
        %v469 = vld [vmem:[#allocation9 + $0x1d8] sm:$0xff]
        %v470 = vld [vmem:[#allocation9 + $0x1e0] sm:$0xff]
        %v471 = vld [vmem:[#allocation9 + $0x1e8] sm:$0xff]
        %v472 = vld [vmem:[#allocation9 + $0x1f0] sm:$0xff]
        %v473 = vld [vmem:[#allocation9 + $0x1f8] sm:$0xff]
        %v474 = vld [vmem:[#allocation9 + $0x200] sm:$0xff]
        %v475 = vld [vmem:[#allocation9 + $0x208] sm:$0xff]
        %v476 = vld [vmem:[#allocation9 + $0x210] sm:$0xff]
        %v477 = vld [vmem:[#allocation9 + $0x218] sm:$0xff]
        %v478 = vld [vmem:[#allocation9 + $0x220] sm:$0xff]
        %v479 = vld [vmem:[#allocation9 + $0x228] sm:$0xff]
        %v480 = vld [vmem:[#allocation9 + $0x230] sm:$0xff]
        %v481 = vld [vmem:[#allocation9 + $0x238] sm:$0xff]
        %v482 = vld [vmem:[#allocation9 + $0x240] sm:$0xff]
        %v483 = vld [vmem:[#allocation9 + $0x248] sm:$0xff]
        %v484 = vld [vmem:[#allocation9 + $0x250] sm:$0xff]
        %v485 = vld [vmem:[#allocation9 + $0x258] sm:$0xff]
        %v486 = vld [vmem:[#allocation9 + $0x260] sm:$0xff]
        %v487 = vld [vmem:[#allocation9 + $0x268] sm:$0xff]
        %v488 = vld [vmem:[#allocation9 + $0x270] sm:$0xff]
        %v489 = vld [vmem:[#allocation9 + $0x278] sm:$0xff]
        %v490 = vld [vmem:[#allocation9 + $0x280] sm:$0xff]
        %v491 = vld [vmem:[#allocation9 + $0x288] sm:$0xff]
        %v492 = vld [vmem:[#allocation9 + $0x290] sm:$0xff]
        %v493 = vld [vmem:[#allocation9 + $0x298] sm:$0xff]
        %v494 = vld [vmem:[#allocation9 + $0x2a0] sm:$0xff]
        %v495 = vld [vmem:[#allocation9 + $0x2a8] sm:$0xff]
        %v496 = vld [vmem:[#allocation9 + $0x2b0] sm:$0xff]
        %v497 = vld [vmem:[#allocation9 + $0x2b8] sm:$0xff]
        %v498 = vld [vmem:[#allocation9 + $0x2c0] sm:$0xff]
        %v499 = vld [vmem:[#allocation9 + $0x2c8] sm:$0xff]
        %v500 = vld [vmem:[#allocation9 + $0x2d0] sm:$0xff]
        %v501 = vld [vmem:[#allocation9 + $0x2d8] sm:$0xff]
        %v502 = vld [vmem:[#allocation9 + $0x2e0] sm:$0xff]
        %v503 = vld [vmem:[#allocation9 + $0x2e8] sm:$0xff]
        %v504 = vld [vmem:[#allocation9 + $0x2f0] sm:$0xff]
        %v505 = vld [vmem:[#allocation9 + $0x2f8] sm:$0xff]
        %v506 = vld [vmem:[#allocation9 + $0x300] sm:$0xff]
        %v507 = vld [vmem:[#allocation9 + $0x308] sm:$0xff]
        %v508 = vld [vmem:[#allocation9 + $0x310] sm:$0xff]
        %v509 = vld [vmem:[#allocation9 + $0x318] sm:$0xff]
        %v510 = vld [vmem:[#allocation9 + $0x320] sm:$0xff]
        %v511 = vld [vmem:[#allocation9 + $0x328] sm:$0xff]
        %v512 = vld [vmem:[#allocation9 + $0x330] sm:$0xff]
        %v513 = vld [vmem:[#allocation9 + $0x338] sm:$0xff]
        %v514 = vld [vmem:[#allocation9 + $0x340] sm:$0xff]
        %v515 = vld [vmem:[#allocation9 + $0x348] sm:$0xff]
        %v516 = vld [vmem:[#allocation9 + $0x350] sm:$0xff]
        %v517 = vld [vmem:[#allocation9 + $0x358] sm:$0xff]
        %v518 = vld [vmem:[#allocation9 + $0x360] sm:$0xff]
        %v519 = vld [vmem:[#allocation9 + $0x368] sm:$0xff]
        %v520 = vld [vmem:[#allocation9 + $0x370] sm:$0xff]
        %v521 = vld [vmem:[#allocation9 + $0x378] sm:$0xff]
        %v522 = vld [vmem:[#allocation9 + $0x380] sm:$0xff]
        %v523 = vld [vmem:[#allocation9 + $0x388] sm:$0xff]
        %v524 = vld [vmem:[#allocation9 + $0x390] sm:$0xff]
        %v525 = vld [vmem:[#allocation9 + $0x398] sm:$0xff]
        %v526 = vld [vmem:[#allocation9 + $0x3a0] sm:$0xff]
        %v527 = vld [vmem:[#allocation9 + $0x3a8] sm:$0xff]
        %v528 = vld [vmem:[#allocation9 + $0x3b0] sm:$0xff]
        %v529 = vld [vmem:[#allocation9 + $0x3b8] sm:$0xff]
        %v530 = vld [vmem:[#allocation9 + $0x3c0] sm:$0xff]
        %v531 = vld [vmem:[#allocation9 + $0x3c8] sm:$0xff]
        %v532 = vld [vmem:[#allocation9 + $0x3d0] sm:$0xff]
        %v533 = vld [vmem:[#allocation9 + $0x3d8] sm:$0xff]
        %v534 = vld [vmem:[#allocation9 + $0x3e0] sm:$0xff]
        %v535 = vld [vmem:[#allocation9 + $0x3e8] sm:$0xff]
        %v536 = vld [vmem:[#allocation9 + $0x3f0] sm:$0xff]
        %v537 = vld [vmem:[#allocation9 + $0x3f8] sm:$0xff]
        %v538 = vld [vmem:[%s4] sm:$0xf]
        %v540 = vlaneseq
        %v541 = vshrl.u32 %v540, 7
        %v542 = vsub.s32 0, %v541
        %v543 = vrot.slane %v538, %v542
        %v544 = vlaneseq
        %v545 = vshrl.u32 %v544, 7
        %v546 = vsub.s32 1, %v545
        %v547 = vrot.slane %v538, %v546
        %v548 = vlaneseq
        %v549 = vshrl.u32 %v548, 7
        %v550 = vsub.s32 2, %v549
        %v551 = vrot.slane %v538, %v550
        %v552 = vlaneseq
        %v553 = vshrl.u32 %v552, 7
        %v554 = vsub.s32 3, %v553
        %v555 = vrot.slane %v538, %v554
        %560 = vmatprep.subr.mxu0 %v411
        %561 = vmatpush1.msra.mxu0 %v410
        %562 = vmatprep.subr.mxu0 %v415
        %563 = vmatpush1.msra.mxu0 %v414
        %564 = vmatprep.subr.mxu0 %v419
        %565 = vmatpush1.msra.mxu0 %v418
        %566 = vmatprep.subr.mxu0 %v423
        %567 = vmatpush1.msra.mxu0 %v422
        %568 = vmatprep.subr.mxu0 %v427
        %569 = vmatpush1.msra.mxu0 %v426
        %570 = vmatprep.subr.mxu0 %v431
        %571 = vmatpush1.msra.mxu0 %v430
        %572 = vmatprep.subr.mxu0 %v435
        %573 = vmatpush1.msra.mxu0 %v434
        %574 = vmatprep.subr.mxu0 %v439
        %575 = vmatpush1.msra.mxu0 %v438
        %576 = vmatprep.subr.mxu0 %v443
        %577 = vmatpush1.msra.mxu0 %v442
        %578 = vmatprep.subr.mxu0 %v447
        %579 = vmatpush1.msra.mxu0 %v446
        %580 = vmatprep.subr.mxu0 %v451
        %581 = vmatpush1.msra.mxu0 %v450
        %582 = vmatprep.subr.mxu0 %v455
        %583 = vmatpush1.msra.mxu0 %v454
        %584 = vmatprep.subr.mxu0 %v459
        %585 = vmatpush1.msra.mxu0 %v458
        %586 = vmatprep.subr.mxu0 %v463
        %587 = vmatpush1.msra.mxu0 %v462
        %588 = vmatprep.subr.mxu0 %v467
        %589 = vmatpush1.msra.mxu0 %v466
        %590 = vmatprep.subr.mxu0 %v471
        %591 = vmatpush1.msra.mxu0 %v470
        %592 = vmatprep.subr.mxu0 %v475
        %593 = vmatpush1.msra.mxu0 %v474
        %594 = vmatprep.subr.mxu0 %v479
        %595 = vmatpush1.msra.mxu0 %v478
        %596 = vmatprep.subr.mxu0 %v483
        %597 = vmatpush1.msra.mxu0 %v482
        %598 = vmatprep.subr.mxu0 %v487
        %599 = vmatpush1.msra.mxu0 %v486
        %600 = vmatprep.subr.mxu0 %v491
        %601 = vmatpush1.msra.mxu0 %v490
        %602 = vmatprep.subr.mxu0 %v495
        %603 = vmatpush1.msra.mxu0 %v494
        %604 = vmatprep.subr.mxu0 %v499
        %605 = vmatpush1.msra.mxu0 %v498
        %606 = vmatprep.subr.mxu0 %v503
        %607 = vmatpush1.msra.mxu0 %v502
        %608 = vmatprep.subr.mxu0 %v507
        %609 = vmatpush1.msra.mxu0 %v506
        %610 = vmatprep.subr.mxu0 %v511
        %611 = vmatpush1.msra.mxu0 %v510
        %612 = vmatprep.subr.mxu0 %v515
        %613 = vmatpush1.msra.mxu0 %v514
        %614 = vmatprep.subr.mxu0 %v519
        %615 = vmatpush1.msra.mxu0 %v518
        %616 = vmatprep.subr.mxu0 %v523
        %617 = vmatpush1.msra.mxu0 %v522
        %618 = vmatprep.subr.mxu0 %v527
        %619 = vmatpush1.msra.mxu0 %v526
        %620 = vmatprep.subr.mxu0 %v531
        %621 = vmatpush1.msra.mxu0 %v530
        %622 = vmatprep.subr.mxu0 %v535
        %623 = vmatpush1.msra.mxu0 %v534
        %624 = vmatprep.mubr.f32.mxu0 %v409
        %625 = vmatmul.mubr.f32.gmra.mrb[0].mxu0 %v408
        %v626 = vpop.f32.mrb[0].mxu0
        %v627 = vadd.f32 %v543, %v626
        %v628 = vpop.f32.mrb[0].mxu0
        %v629 = vadd.f32 %v547, %v628
        %630 = vdwg.mxu0
        %631 = vmatprep.subr.mxu0 %v413
        %632 = vmatpush1.msra.mxu0 %v412
        %633 = vmatprep.subr.mxu0 %v417
        %634 = vmatpush1.msra.mxu0 %v416
        %635 = vmatprep.subr.mxu0 %v421
        %636 = vmatpush1.msra.mxu0 %v420
        %637 = vmatprep.subr.mxu0 %v425
        %638 = vmatpush1.msra.mxu0 %v424
        %639 = vmatprep.subr.mxu0 %v429
        %640 = vmatpush1.msra.mxu0 %v428
        %641 = vmatprep.subr.mxu0 %v433
        %642 = vmatpush1.msra.mxu0 %v432
        %643 = vmatprep.subr.mxu0 %v437
        %644 = vmatpush1.msra.mxu0 %v436
        %645 = vmatprep.subr.mxu0 %v441
        %646 = vmatpush1.msra.mxu0 %v440
        %647 = vmatprep.subr.mxu0 %v445
        %648 = vmatpush1.msra.mxu0 %v444
        %649 = vmatprep.subr.mxu0 %v449
        %650 = vmatpush1.msra.mxu0 %v448
        %651 = vmatprep.subr.mxu0 %v453
        %652 = vmatpush1.msra.mxu0 %v452
        %653 = vmatprep.subr.mxu0 %v457
        %654 = vmatpush1.msra.mxu0 %v456
        %655 = vmatprep.subr.mxu0 %v461
        %656 = vmatpush1.msra.mxu0 %v460
        %657 = vmatprep.subr.mxu0 %v465
        %658 = vmatpush1.msra.mxu0 %v464
        %659 = vmatprep.subr.mxu0 %v469
        %660 = vmatpush1.msra.mxu0 %v468
        %661 = vmatprep.subr.mxu0 %v473
        %662 = vmatpush1.msra.mxu0 %v472
        %663 = vmatprep.subr.mxu0 %v477
        %664 = vmatpush1.msra.mxu0 %v476
        %665 = vmatprep.subr.mxu0 %v481
        %666 = vmatpush1.msra.mxu0 %v480
        %667 = vmatprep.subr.mxu0 %v485
        %668 = vmatpush1.msra.mxu0 %v484
        %669 = vmatprep.subr.mxu0 %v489
        %670 = vmatpush1.msra.mxu0 %v488
        %671 = vmatprep.subr.mxu0 %v493
        %672 = vmatpush1.msra.mxu0 %v492
        %673 = vmatprep.subr.mxu0 %v497
        %674 = vmatpush1.msra.mxu0 %v496
        %675 = vmatprep.subr.mxu0 %v501
        %676 = vmatpush1.msra.mxu0 %v500
        %677 = vmatprep.subr.mxu0 %v505
        %678 = vmatpush1.msra.mxu0 %v504
        %679 = vmatprep.subr.mxu0 %v509
        %680 = vmatpush1.msra.mxu0 %v508
        %681 = vmatprep.subr.mxu0 %v513
        %682 = vmatpush1.msra.mxu0 %v512
        %683 = vmatprep.subr.mxu0 %v517
        %684 = vmatpush1.msra.mxu0 %v516
        %685 = vmatprep.subr.mxu0 %v521
        %686 = vmatpush1.msra.mxu0 %v520
        %687 = vmatprep.subr.mxu0 %v525
        %688 = vmatpush1.msra.mxu0 %v524
        %689 = vmatprep.subr.mxu0 %v529
        %690 = vmatpush1.msra.mxu0 %v528
        %691 = vmatprep.subr.mxu0 %v533
        %692 = vmatpush1.msra.mxu0 %v532
        %693 = vmatprep.subr.mxu0 %v537
        %694 = vmatpush1.msra.mxu0 %v536
        %695 = vmatprep.mubr.f32.mxu0 %v409
        %696 = vmatmul.mubr.f32.gmra.mrb[0].mxu0 %v408
        %v697 = vpop.f32.mrb[0].mxu0
        %v698 = vadd.f32 %v551, %v697
        %v699 = vpop.f32.mrb[0].mxu0
        %v700 = vadd.f32 %v555, %v699
        %701 = vdwg.mxu0
        %v702 = vxor.u32 %v627, 2147483648
        %v703 = vmul.f32 %v702, 1.442695
        %v704 = vpow.pop %v703
        %v705 = vadd.f32 %v704, 1.0
        %v706 = vrcp.pop %v705
        %v707 = vmul.f32 1.0, %v706
        %v708 = vxor.u32 %v629, 2147483648
        %v709 = vmul.f32 %v708, 1.442695
        %v710 = vpow.pop %v709
        %v711 = vadd.f32 %v710, 1.0
        %v712 = vrcp.pop %v711
        %v713 = vmul.f32 1.0, %v712
        %v714 = vmul.f32 %v707, %v700
        %v715 = vadd.f32 %v698, %v714
        %v716 = vtanh.pop %v715
        %v717 = vsub.f32 1.0, %v713
        %v718 = vmul.f32 %v717, %v716
        %v719 = vmul.f32 %v713, %v409
        %v720 = vadd.f32 %v718, %v719
        %721 = vst [vmem:[#allocation2] sm:$0xff] %v720
        %s722 = scalar_lea.vmem [#allocation2], 8
        %v723 = vld [vmem:[%s722] sm:$0xff]
        %s724 = scalar_lea.vmem [#allocation9], 1024
        %v725 = vld [vmem:[%s724] sm:$0xff]
        %v726 = vld [vmem:[%s724 + $0x8] sm:$0xff]
        %v727 = vld [vmem:[%s724 + $0x10] sm:$0xff]
        %v728 = vld [vmem:[%s724 + $0x18] sm:$0xff]
        %v729 = vld [vmem:[%s724 + $0x20] sm:$0xff]
        %v730 = vld [vmem:[%s724 + $0x28] sm:$0xff]
        %v731 = vld [vmem:[%s724 + $0x30] sm:$0xff]
        %v732 = vld [vmem:[%s724 + $0x38] sm:$0xff]
        %v733 = vld [vmem:[%s724 + $0x40] sm:$0xff]
        %v734 = vld [vmem:[%s724 + $0x48] sm:$0xff]
        %v735 = vld [vmem:[%s724 + $0x50] sm:$0xff]
        %v736 = vld [vmem:[%s724 + $0x58] sm:$0xff]
        %v737 = vld [vmem:[%s724 + $0x60] sm:$0xff]
        %v738 = vld [vmem:[%s724 + $0x68] sm:$0xff]
        %v739 = vld [vmem:[%s724 + $0x70] sm:$0xff]
        %v740 = vld [vmem:[%s724 + $0x78] sm:$0xff]
        %v741 = vld [vmem:[%s724 + $0x80] sm:$0xff]
        %v742 = vld [vmem:[%s724 + $0x88] sm:$0xff]
        %v743 = vld [vmem:[%s724 + $0x90] sm:$0xff]
        %v744 = vld [vmem:[%s724 + $0x98] sm:$0xff]
        %v745 = vld [vmem:[%s724 + $0xa0] sm:$0xff]
        %v746 = vld [vmem:[%s724 + $0xa8] sm:$0xff]
        %v747 = vld [vmem:[%s724 + $0xb0] sm:$0xff]
        %v748 = vld [vmem:[%s724 + $0xb8] sm:$0xff]
        %v749 = vld [vmem:[%s724 + $0xc0] sm:$0xff]
        %v750 = vld [vmem:[%s724 + $0xc8] sm:$0xff]
        %v751 = vld [vmem:[%s724 + $0xd0] sm:$0xff]
        %v752 = vld [vmem:[%s724 + $0xd8] sm:$0xff]
        %v753 = vld [vmem:[%s724 + $0xe0] sm:$0xff]
        %v754 = vld [vmem:[%s724 + $0xe8] sm:$0xff]
        %v755 = vld [vmem:[%s724 + $0xf0] sm:$0xff]
        %v756 = vld [vmem:[%s724 + $0xf8] sm:$0xff]
        %v757 = vld [vmem:[%s724 + $0x100] sm:$0xff]
        %v758 = vld [vmem:[%s724 + $0x108] sm:$0xff]
        %v759 = vld [vmem:[%s724 + $0x110] sm:$0xff]
        %v760 = vld [vmem:[%s724 + $0x118] sm:$0xff]
        %v761 = vld [vmem:[%s724 + $0x120] sm:$0xff]
        %v762 = vld [vmem:[%s724 + $0x128] sm:$0xff]
        %v763 = vld [vmem:[%s724 + $0x130] sm:$0xff]
        %v764 = vld [vmem:[%s724 + $0x138] sm:$0xff]
        %v765 = vld [vmem:[%s724 + $0x140] sm:$0xff]
        %v766 = vld [vmem:[%s724 + $0x148] sm:$0xff]
        %v767 = vld [vmem:[%s724 + $0x150] sm:$0xff]
        %v768 = vld [vmem:[%s724 + $0x158] sm:$0xff]
        %v769 = vld [vmem:[%s724 + $0x160] sm:$0xff]
        %v770 = vld [vmem:[%s724 + $0x168] sm:$0xff]
        %v771 = vld [vmem:[%s724 + $0x170] sm:$0xff]
        %v772 = vld [vmem:[%s724 + $0x178] sm:$0xff]
        %v773 = vld [vmem:[%s724 + $0x180] sm:$0xff]
        %v774 = vld [vmem:[%s724 + $0x188] sm:$0xff]
        %v775 = vld [vmem:[%s724 + $0x190] sm:$0xff]
        %v776 = vld [vmem:[%s724 + $0x198] sm:$0xff]
        %v777 = vld [vmem:[%s724 + $0x1a0] sm:$0xff]
        %v778 = vld [vmem:[%s724 + $0x1a8] sm:$0xff]
        %v779 = vld [vmem:[%s724 + $0x1b0] sm:$0xff]
        %v780 = vld [vmem:[%s724 + $0x1b8] sm:$0xff]
        %v781 = vld [vmem:[%s724 + $0x1c0] sm:$0xff]
        %v782 = vld [vmem:[%s724 + $0x1c8] sm:$0xff]
        %v783 = vld [vmem:[%s724 + $0x1d0] sm:$0xff]
        %v784 = vld [vmem:[%s724 + $0x1d8] sm:$0xff]
        %v785 = vld [vmem:[%s724 + $0x1e0] sm:$0xff]
        %v786 = vld [vmem:[%s724 + $0x1e8] sm:$0xff]
        %v787 = vld [vmem:[%s724 + $0x1f0] sm:$0xff]
        %v788 = vld [vmem:[%s724 + $0x1f8] sm:$0xff]
        %v789 = vld [vmem:[%s724 + $0x200] sm:$0xff]
        %v790 = vld [vmem:[%s724 + $0x208] sm:$0xff]
        %v791 = vld [vmem:[%s724 + $0x210] sm:$0xff]
        %v792 = vld [vmem:[%s724 + $0x218] sm:$0xff]
        %v793 = vld [vmem:[%s724 + $0x220] sm:$0xff]
        %v794 = vld [vmem:[%s724 + $0x228] sm:$0xff]
        %v795 = vld [vmem:[%s724 + $0x230] sm:$0xff]
        %v796 = vld [vmem:[%s724 + $0x238] sm:$0xff]
        %v797 = vld [vmem:[%s724 + $0x240] sm:$0xff]
        %v798 = vld [vmem:[%s724 + $0x248] sm:$0xff]
        %v799 = vld [vmem:[%s724 + $0x250] sm:$0xff]
        %v800 = vld [vmem:[%s724 + $0x258] sm:$0xff]
        %v801 = vld [vmem:[%s724 + $0x260] sm:$0xff]
        %v802 = vld [vmem:[%s724 + $0x268] sm:$0xff]
        %v803 = vld [vmem:[%s724 + $0x270] sm:$0xff]
        %v804 = vld [vmem:[%s724 + $0x278] sm:$0xff]
        %v805 = vld [vmem:[%s724 + $0x280] sm:$0xff]
        %v806 = vld [vmem:[%s724 + $0x288] sm:$0xff]
        %v807 = vld [vmem:[%s724 + $0x290] sm:$0xff]
        %v808 = vld [vmem:[%s724 + $0x298] sm:$0xff]
        %v809 = vld [vmem:[%s724 + $0x2a0] sm:$0xff]
        %v810 = vld [vmem:[%s724 + $0x2a8] sm:$0xff]
        %v811 = vld [vmem:[%s724 + $0x2b0] sm:$0xff]
        %v812 = vld [vmem:[%s724 + $0x2b8] sm:$0xff]
        %v813 = vld [vmem:[%s724 + $0x2c0] sm:$0xff]
        %v814 = vld [vmem:[%s724 + $0x2c8] sm:$0xff]
        %v815 = vld [vmem:[%s724 + $0x2d0] sm:$0xff]
        %v816 = vld [vmem:[%s724 + $0x2d8] sm:$0xff]
        %v817 = vld [vmem:[%s724 + $0x2e0] sm:$0xff]
        %v818 = vld [vmem:[%s724 + $0x2e8] sm:$0xff]
        %v819 = vld [vmem:[%s724 + $0x2f0] sm:$0xff]
        %v820 = vld [vmem:[%s724 + $0x2f8] sm:$0xff]
        %v821 = vld [vmem:[%s724 + $0x300] sm:$0xff]
        %v822 = vld [vmem:[%s724 + $0x308] sm:$0xff]
        %v823 = vld [vmem:[%s724 + $0x310] sm:$0xff]
        %v824 = vld [vmem:[%s724 + $0x318] sm:$0xff]
        %v825 = vld [vmem:[%s724 + $0x320] sm:$0xff]
        %v826 = vld [vmem:[%s724 + $0x328] sm:$0xff]
        %v827 = vld [vmem:[%s724 + $0x330] sm:$0xff]
        %v828 = vld [vmem:[%s724 + $0x338] sm:$0xff]
        %v829 = vld [vmem:[%s724 + $0x340] sm:$0xff]
        %v830 = vld [vmem:[%s724 + $0x348] sm:$0xff]
        %v831 = vld [vmem:[%s724 + $0x350] sm:$0xff]
        %v832 = vld [vmem:[%s724 + $0x358] sm:$0xff]
        %v833 = vld [vmem:[%s724 + $0x360] sm:$0xff]
        %v834 = vld [vmem:[%s724 + $0x368] sm:$0xff]
        %v835 = vld [vmem:[%s724 + $0x370] sm:$0xff]
        %v836 = vld [vmem:[%s724 + $0x378] sm:$0xff]
        %v837 = vld [vmem:[%s724 + $0x380] sm:$0xff]
        %v838 = vld [vmem:[%s724 + $0x388] sm:$0xff]
        %v839 = vld [vmem:[%s724 + $0x390] sm:$0xff]
        %v840 = vld [vmem:[%s724 + $0x398] sm:$0xff]
        %v841 = vld [vmem:[%s724 + $0x3a0] sm:$0xff]
        %v842 = vld [vmem:[%s724 + $0x3a8] sm:$0xff]
        %v843 = vld [vmem:[%s724 + $0x3b0] sm:$0xff]
        %v844 = vld [vmem:[%s724 + $0x3b8] sm:$0xff]
        %v845 = vld [vmem:[%s724 + $0x3c0] sm:$0xff]
        %v846 = vld [vmem:[%s724 + $0x3c8] sm:$0xff]
        %v847 = vld [vmem:[%s724 + $0x3d0] sm:$0xff]
        %v848 = vld [vmem:[%s724 + $0x3d8] sm:$0xff]
        %v849 = vld [vmem:[%s724 + $0x3e0] sm:$0xff]
        %v850 = vld [vmem:[%s724 + $0x3e8] sm:$0xff]
        %v851 = vld [vmem:[%s724 + $0x3f0] sm:$0xff]
        %v852 = vld [vmem:[%s724 + $0x3f8] sm:$0xff]
        %s853 = scalar_lea.vmem %s4, 4
        %v854 = vld [vmem:[%s853] sm:$0xf]
        %v856 = vlaneseq
        %v857 = vshrl.u32 %v856, 7
        %v858 = vsub.s32 0, %v857
        %v859 = vrot.slane %v854, %v858
        %v860 = vlaneseq
        %v861 = vshrl.u32 %v860, 7
        %v862 = vsub.s32 1, %v861
        %v863 = vrot.slane %v854, %v862
        %v864 = vlaneseq
        %v865 = vshrl.u32 %v864, 7
        %v866 = vsub.s32 2, %v865
        %v867 = vrot.slane %v854, %v866
        %v868 = vlaneseq
        %v869 = vshrl.u32 %v868, 7
        %v870 = vsub.s32 3, %v869
        %v871 = vrot.slane %v854, %v870
        %876 = vmatprep.subr.mxu0 %v726
        %877 = vmatpush1.msra.mxu0 %v725
        %878 = vmatprep.subr.mxu0 %v730
        %879 = vmatpush1.msra.mxu0 %v729
        %880 = vmatprep.subr.mxu0 %v734
        %881 = vmatpush1.msra.mxu0 %v733
        %882 = vmatprep.subr.mxu0 %v738
        %883 = vmatpush1.msra.mxu0 %v737
        %884 = vmatprep.subr.mxu0 %v742
        %885 = vmatpush1.msra.mxu0 %v741
        %886 = vmatprep.subr.mxu0 %v746
        %887 = vmatpush1.msra.mxu0 %v745
        %888 = vmatprep.subr.mxu0 %v750
        %889 = vmatpush1.msra.mxu0 %v749
        %890 = vmatprep.subr.mxu0 %v754
        %891 = vmatpush1.msra.mxu0 %v753
        %892 = vmatprep.subr.mxu0 %v758
        %893 = vmatpush1.msra.mxu0 %v757
        %894 = vmatprep.subr.mxu0 %v762
        %895 = vmatpush1.msra.mxu0 %v761
        %896 = vmatprep.subr.mxu0 %v766
        %897 = vmatpush1.msra.mxu0 %v765
        %898 = vmatprep.subr.mxu0 %v770
        %899 = vmatpush1.msra.mxu0 %v769
        %900 = vmatprep.subr.mxu0 %v774
        %901 = vmatpush1.msra.mxu0 %v773
        %902 = vmatprep.subr.mxu0 %v778
        %903 = vmatpush1.msra.mxu0 %v777
        %904 = vmatprep.subr.mxu0 %v782
        %905 = vmatpush1.msra.mxu0 %v781
        %906 = vmatprep.subr.mxu0 %v786
        %907 = vmatpush1.msra.mxu0 %v785
        %908 = vmatprep.subr.mxu0 %v790
        %909 = vmatpush1.msra.mxu0 %v789
        %910 = vmatprep.subr.mxu0 %v794
        %911 = vmatpush1.msra.mxu0 %v793
        %912 = vmatprep.subr.mxu0 %v798
        %913 = vmatpush1.msra.mxu0 %v797
        %914 = vmatprep.subr.mxu0 %v802
        %915 = vmatpush1.msra.mxu0 %v801
        %916 = vmatprep.subr.mxu0 %v806
        %917 = vmatpush1.msra.mxu0 %v805
        %918 = vmatprep.subr.mxu0 %v810
        %919 = vmatpush1.msra.mxu0 %v809
        %920 = vmatprep.subr.mxu0 %v814
        %921 = vmatpush1.msra.mxu0 %v813
        %922 = vmatprep.subr.mxu0 %v818
        %923 = vmatpush1.msra.mxu0 %v817
        %924 = vmatprep.subr.mxu0 %v822
        %925 = vmatpush1.msra.mxu0 %v821
        %926 = vmatprep.subr.mxu0 %v826
        %927 = vmatpush1.msra.mxu0 %v825
        %928 = vmatprep.subr.mxu0 %v830
        %929 = vmatpush1.msra.mxu0 %v829
        %930 = vmatprep.subr.mxu0 %v834
        %931 = vmatpush1.msra.mxu0 %v833
        %932 = vmatprep.subr.mxu0 %v838
        %933 = vmatpush1.msra.mxu0 %v837
        %934 = vmatprep.subr.mxu0 %v842
        %935 = vmatpush1.msra.mxu0 %v841
        %936 = vmatprep.subr.mxu0 %v846
        %937 = vmatpush1.msra.mxu0 %v845
        %938 = vmatprep.subr.mxu0 %v850
        %939 = vmatpush1.msra.mxu0 %v849
        %940 = vmatprep.mubr.f32.mxu0 %v723
        %941 = vmatmul.mubr.f32.gmra.mrb[0].mxu0 %v720
        %v942 = vpop.f32.mrb[0].mxu0
        %v943 = vadd.f32 %v859, %v942
        %v944 = vpop.f32.mrb[0].mxu0
        %v945 = vadd.f32 %v863, %v944
        %946 = vdwg.mxu0
        %947 = vmatprep.subr.mxu0 %v728
        %948 = vmatpush1.msra.mxu0 %v727
        %949 = vmatprep.subr.mxu0 %v732
        %950 = vmatpush1.msra.mxu0 %v731
        %951 = vmatprep.subr.mxu0 %v736
        %952 = vmatpush1.msra.mxu0 %v735
        %953 = vmatprep.subr.mxu0 %v740
        %954 = vmatpush1.msra.mxu0 %v739
        %955 = vmatprep.subr.mxu0 %v744
        %956 = vmatpush1.msra.mxu0 %v743
        %957 = vmatprep.subr.mxu0 %v748
        %958 = vmatpush1.msra.mxu0 %v747
        %959 = vmatprep.subr.mxu0 %v752
        %960 = vmatpush1.msra.mxu0 %v751
        %961 = vmatprep.subr.mxu0 %v756
        %962 = vmatpush1.msra.mxu0 %v755
        %963 = vmatprep.subr.mxu0 %v760
        %964 = vmatpush1.msra.mxu0 %v759
        %965 = vmatprep.subr.mxu0 %v764
        %966 = vmatpush1.msra.mxu0 %v763
        %967 = vmatprep.subr.mxu0 %v768
        %968 = vmatpush1.msra.mxu0 %v767
        %969 = vmatprep.subr.mxu0 %v772
        %970 = vmatpush1.msra.mxu0 %v771
        %971 = vmatprep.subr.mxu0 %v776
        %972 = vmatpush1.msra.mxu0 %v775
        %973 = vmatprep.subr.mxu0 %v780
        %974 = vmatpush1.msra.mxu0 %v779
        %975 = vmatprep.subr.mxu0 %v784
        %976 = vmatpush1.msra.mxu0 %v783
        %977 = vmatprep.subr.mxu0 %v788
        %978 = vmatpush1.msra.mxu0 %v787
        %979 = vmatprep.subr.mxu0 %v792
        %980 = vmatpush1.msra.mxu0 %v791
        %981 = vmatprep.subr.mxu0 %v796
        %982 = vmatpush1.msra.mxu0 %v795
        %983 = vmatprep.subr.mxu0 %v800
        %984 = vmatpush1.msra.mxu0 %v799
        %985 = vmatprep.subr.mxu0 %v804
        %986 = vmatpush1.msra.mxu0 %v803
        %987 = vmatprep.subr.mxu0 %v808
        %988 = vmatpush1.msra.mxu0 %v807
        %989 = vmatprep.subr.mxu0 %v812
        %990 = vmatpush1.msra.mxu0 %v811
        %991 = vmatprep.subr.mxu0 %v816
        %992 = vmatpush1.msra.mxu0 %v815
        %993 = vmatprep.subr.mxu0 %v820
        %994 = vmatpush1.msra.mxu0 %v819
        %995 = vmatprep.subr.mxu0 %v824
        %996 = vmatpush1.msra.mxu0 %v823
        %997 = vmatprep.subr.mxu0 %v828
        %998 = vmatpush1.msra.mxu0 %v827
        %999 = vmatprep.subr.mxu0 %v832
        %1000 = vmatpush1.msra.mxu0 %v831
        %1001 = vmatprep.subr.mxu0 %v836
        %1002 = vmatpush1.msra.mxu0 %v835
        %1003 = vmatprep.subr.mxu0 %v840
        %1004 = vmatpush1.msra.mxu0 %v839
        %1005 = vmatprep.subr.mxu0 %v844
        %1006 = vmatpush1.msra.mxu0 %v843
        %1007 = vmatprep.subr.mxu0 %v848
        %1008 = vmatpush1.msra.mxu0 %v847
        %1009 = vmatprep.subr.mxu0 %v852
        %1010 = vmatpush1.msra.mxu0 %v851
        %1011 = vmatprep.mubr.f32.mxu0 %v723
        %1012 = vmatmul.mubr.f32.gmra.mrb[0].mxu0 %v720
        %v1013 = vpop.f32.mrb[0].mxu0
        %v1014 = vadd.f32 %v867, %v1013
        %v1015 = vpop.f32.mrb[0].mxu0
        %v1016 = vadd.f32 %v871, %v1015
        %1017 = vdwg.mxu0
        %v1018 = vxor.u32 %v943, 2147483648
        %v1019 = vmul.f32 %v1018, 1.442695
        %v1020 = vpow.pop %v1019
        %v1021 = vadd.f32 %v1020, 1.0
        %v1022 = vrcp.pop %v1021
        %v1023 = vmul.f32 1.0, %v1022
        %v1024 = vxor.u32 %v945, 2147483648
        %v1025 = vmul.f32 %v1024, 1.442695
        %v1026 = vpow.pop %v1025
        %v1027 = vadd.f32 %v1026, 1.0
        %v1028 = vrcp.pop %v1027
        %v1029 = vmul.f32 1.0, %v1028
        %v1030 = vmul.f32 %v1023, %v1016
        %v1031 = vadd.f32 %v1014, %v1030
        %v1032 = vtanh.pop %v1031
        %v1033 = vsub.f32 1.0, %v1029
        %v1034 = vmul.f32 %v1033, %v1032
        %v1035 = vmul.f32 %v1029, %v723
        %v1036 = vadd.f32 %v1034, %v1035
        %1037 = vst [vmem:[%s722] sm:$0xff] %v1036
        %v1038 = vld [vmem:[#allocation11] sm:$0xff]
        %v1039 = vld [vmem:[#allocation11 + $0x8] sm:$0xff]
        %v1040 = vld [vmem:[#allocation11 + $0x10] sm:$0xff]
        %v1041 = vld [vmem:[#allocation11 + $0x18] sm:$0xff]
        %v1042 = vld [vmem:[#allocation11 + $0x20] sm:$0xff]
        %v1043 = vld [vmem:[#allocation11 + $0x28] sm:$0xff]
        %v1044 = vld [vmem:[#allocation11 + $0x30] sm:$0xff]
        %v1045 = vld [vmem:[#allocation11 + $0x38] sm:$0xff]
        %v1046 = vld [vmem:[#allocation11 + $0x40] sm:$0xff]
        %v1047 = vld [vmem:[#allocation11 + $0x48] sm:$0xff]
        %v1048 = vld [vmem:[#allocation11 + $0x50] sm:$0xff]
        %v1049 = vld [vmem:[#allocation11 + $0x58] sm:$0xff]
        %v1050 = vld [vmem:[#allocation11 + $0x60] sm:$0xff]
        %v1051 = vld [vmem:[#allocation11 + $0x68] sm:$0xff]
        %v1052 = vld [vmem:[#allocation11 + $0x70] sm:$0xff]
        %v1053 = vld [vmem:[#allocation11 + $0x78] sm:$0xff]
        %v1054 = vld [vmem:[#allocation11 + $0x80] sm:$0xff]
        %v1055 = vld [vmem:[#allocation11 + $0x88] sm:$0xff]
        %v1056 = vld [vmem:[#allocation11 + $0x90] sm:$0xff]
        %v1057 = vld [vmem:[#allocation11 + $0x98] sm:$0xff]
        %v1058 = vld [vmem:[#allocation11 + $0xa0] sm:$0xff]
        %v1059 = vld [vmem:[#allocation11 + $0xa8] sm:$0xff]
        %v1060 = vld [vmem:[#allocation11 + $0xb0] sm:$0xff]
        %v1061 = vld [vmem:[#allocation11 + $0xb8] sm:$0xff]
        %v1062 = vld [vmem:[#allocation11 + $0xc0] sm:$0xff]
        %v1063 = vld [vmem:[#allocation11 + $0xc8] sm:$0xff]
        %v1064 = vld [vmem:[#allocation11 + $0xd0] sm:$0xff]
        %v1065 = vld [vmem:[#allocation11 + $0xd8] sm:$0xff]
        %v1066 = vld [vmem:[#allocation11 + $0xe0] sm:$0xff]
        %v1067 = vld [vmem:[#allocation11 + $0xe8] sm:$0xff]
        %v1068 = vld [vmem:[#allocation11 + $0xf0] sm:$0xff]
        %v1069 = vld [vmem:[#allocation11 + $0xf8] sm:$0xff]
        %v1070 = vld [vmem:[%s6] sm:$0x3]
        %v1072 = vlaneseq
        %v1073 = vshrl.u32 %v1072, 7
        %v1074 = vsub.s32 0, %v1073
        %v1075 = vrot.slane %v1070, %v1074
        %v1076 = vlaneseq
        %v1077 = vshrl.u32 %v1076, 7
        %v1078 = vsub.s32 1, %v1077
        %v1079 = vrot.slane %v1070, %v1078
        %1082 = vmatprep.subr.mxu0 %v1039
        %1083 = vmatpush1.msra.mxu0 %v1038
        %1084 = vmatprep.subr.mxu0 %v1041
        %1085 = vmatpush1.msra.mxu0 %v1040
        %1086 = vmatprep.subr.mxu0 %v1043
        %1087 = vmatpush1.msra.mxu0 %v1042
        %1088 = vmatprep.subr.mxu0 %v1045
        %1089 = vmatpush1.msra.mxu0 %v1044
        %1090 = vmatprep.subr.mxu0 %v1047
        %1091 = vmatpush1.msra.mxu0 %v1046
        %1092 = vmatprep.subr.mxu0 %v1049
        %1093 = vmatpush1.msra.mxu0 %v1048
        %1094 = vmatprep.subr.mxu0 %v1051
        %1095 = vmatpush1.msra.mxu0 %v1050
        %1096 = vmatprep.subr.mxu0 %v1053
        %1097 = vmatpush1.msra.mxu0 %v1052
        %1098 = vmatprep.subr.mxu0 %v1055
        %1099 = vmatpush1.msra.mxu0 %v1054
        %1100 = vmatprep.subr.mxu0 %v1057
        %1101 = vmatpush1.msra.mxu0 %v1056
        %1102 = vmatprep.subr.mxu0 %v1059
        %1103 = vmatpush1.msra.mxu0 %v1058
        %1104 = vmatprep.subr.mxu0 %v1061
        %1105 = vmatpush1.msra.mxu0 %v1060
        %1106 = vmatprep.subr.mxu0 %v1063
        %1107 = vmatpush1.msra.mxu0 %v1062
        %1108 = vmatprep.subr.mxu0 %v1065
        %1109 = vmatpush1.msra.mxu0 %v1064
        %1110 = vmatprep.subr.mxu0 %v1067
        %1111 = vmatpush1.msra.mxu0 %v1066
        %1112 = vmatprep.subr.mxu0 %v1069
        %1113 = vmatpush1.msra.mxu0 %v1068
        %1114 = vmatprep.subr.mxu0 0.0
        %1115 = vmatpush1.msra.mxu0 0.0
        %1116 = vmatprep.subr.mxu0 0.0
        %1117 = vmatpush1.msra.mxu0 0.0
        %1118 = vmatprep.subr.mxu0 0.0
        %1119 = vmatpush1.msra.mxu0 0.0
        %1120 = vmatprep.subr.mxu0 0.0
        %1121 = vmatpush1.msra.mxu0 0.0
        %1122 = vmatprep.subr.mxu0 0.0
        %1123 = vmatpush1.msra.mxu0 0.0
        %1124 = vmatprep.subr.mxu0 0.0
        %1125 = vmatpush1.msra.mxu0 0.0
        %1126 = vmatprep.subr.mxu0 0.0
        %1127 = vmatpush1.msra.mxu0 0.0
        %1128 = vmatprep.subr.mxu0 0.0
        %1129 = vmatpush1.msra.mxu0 0.0
        %1130 = vmatprep.subr.mxu0 0.0
        %1131 = vmatpush1.msra.mxu0 0.0
        %1132 = vmatprep.subr.mxu0 0.0
        %1133 = vmatpush1.msra.mxu0 0.0
        %1134 = vmatprep.subr.mxu0 0.0
        %1135 = vmatpush1.msra.mxu0 0.0
        %1136 = vmatprep.subr.mxu0 0.0
        %1137 = vmatpush1.msra.mxu0 0.0
        %1138 = vmatprep.subr.mxu0 0.0
        %1139 = vmatpush1.msra.mxu0 0.0
        %1140 = vmatprep.subr.mxu0 0.0
        %1141 = vmatpush1.msra.mxu0 0.0
        %1142 = vmatprep.subr.mxu0 0.0
        %1143 = vmatpush1.msra.mxu0 0.0
        %1144 = vmatprep.subr.mxu0 0.0
        %1145 = vmatpush1.msra.mxu0 0.0
        %1146 = vmatprep.mubr.f32.mxu0 0.0
        %1147 = vmatmul.mubr.f32.gmra.mrb[0].mxu0 %v1036
        %v1148 = vpop.f32.mrb[0].mxu0
        %v1149 = vadd.f32 %v1075, %v1148
        %v1150 = vpop.f32.mrb[0].mxu0
        %v1151 = vadd.f32 %v1079, %v1150
        %1152 = vdwg.mxu0
        %v1153 = vld [vmem:[%s350] sm:$0xff]
        %v1154 = vmul.f32 %v1151, 0.5
        %v1155 = vmul.f32 %v1154, 1.442695
        %v1156 = vpow.pop %v1155
        %v1157 = vmul.f32 %v1153, %v1156
        %v1158 = vadd.f32 %v1157, %v1149
        %1159 = vst [vmem:[%s397] sm:$0xff] %v1158
        %1160 = vst [vmem:[%s397 + $0x8] sm:$0xff] %v1149
        %1161 = vst [vmem:[%s397 + $0x10] sm:$0xff] %v1151
        %p1162 = scmp.eq.s32.totalorder %s31, 7
        // Predicated region
        $region73: #{tpu_custom_call.1} parent=47 // pred_check
          %p1163 = pneg %p1162
        $region74: #{tpu_custom_call.1} parent=47 // pred_check_branch
          %1165 = sbr.rel (%p1163) target = $region76
        $region75: #{tpu_custom_call.1} parent=47 // pred_region
          %v1166 = vld [vmem:[#allocation2] sm:$0xff]
          %v1167 = vld [vmem:[#allocation2 + $0x8] sm:$0xff]
          %1168 = vst [vmem:[#allocation13] sm:$0xff] %v1166
          %1169 = vst [vmem:[#allocation13 + $0x8] sm:$0xff] %v1167
        $region76: #{tpu_custom_call.1} parent=47 // pred_fallthru
          _
        %s1170 = sand.u32 %s196, 1
        %s1171 = scalar_lea.sflag [#allocation5], %s1170
        %s1172 = sand.u32 %s196, 1
        %s1173 = smul.addr %s1172, 24
        %s1174 = scalar_lea.vmem [#allocation12], %s1173
        // Predicated region
        $region77: #{tpu_custom_call.1} parent=47 // pred_check
          %p1175 = pneg %p206
        $region78: #{tpu_custom_call.1} parent=47 // pred_check_branch
          %1177 = sbr.rel (%p1175) target = $region80
        $region79: #{tpu_custom_call.1} parent=47 // pred_region
          %s1179 = ssub.s32 384, 384
          %1180 = vsyncadd %s1171, %s1179
          %s1181 = smul.addr %s31, 3
          %s1182 = smul.addr %s1181, 128
          %s1183 = scalar_lea.hbm %s7, %s1182
          %s1185 = sshll.u32 %s1174, 4
          %s1186 = int_to_ptr.vmem [resolvable:$true] %s1185
          %1188 = dma.vmem_to_hbm [thread:$0]  %s1186, 384, %s1183, %s1171
        $region80: #{tpu_custom_call.1} parent=47 // pred_fallthru
          _
        // Predicated region
        $region81: #{tpu_custom_call.1} parent=47 // pred_check
          %p1189 = pneg %p227
        $region82: #{tpu_custom_call.1} parent=47 // pred_check_branch
          %1191 = sbr.rel (%p1189) target = $region84
        $region83: #{tpu_custom_call.1} parent=47 // pred_region
          %s1193 = ssub.s32 256, 256
          %1194 = vsyncadd [#allocation14], %s1193
          %s1195 = sshll.u32 [#allocation13], 4
          %s1196 = int_to_ptr.vmem [resolvable:$true] %s1195
          %1201 = dma.vmem_to_hbm [thread:$0]  %s1196, 256, %s8, [#allocation14], 128, 128, 8
        $region84: #{tpu_custom_call.1} parent=47 // pred_fallthru
          _
        // Predicated region
        $region85: #{tpu_custom_call.1} parent=47 // pred_check
          %p1202 = pneg %p227
        $region86: #{tpu_custom_call.1} parent=47 // pred_check_branch
          %1204 = sbr.rel (%p1202) target = $region88
        $region87: #{tpu_custom_call.1} parent=47 // pred_region
          %1205 = dma.done [#allocation14], 256
        $region88: #{tpu_custom_call.1} parent=47 // pred_fallthru
          _
      $region48: #{tpu_custom_call.1} parent=5 // pred_fallthru
        _
      %p1206 = scmp.le.s32.totalorder 2, %s26
      // Predicated region
      $region89: #{tpu_custom_call.1} parent=5 // pred_check
        %p1207 = pneg %p1206
      $region90: #{tpu_custom_call.1} parent=5 // pred_check_branch
        %1209 = sbr.rel (%p1207) target = $region92
      $region91: #{tpu_custom_call.1} parent=5 // pred_region
        %s1210 = ssub.s32 %s26, 2
        // Predicated region
        $region93: #{tpu_custom_call.1} parent=91 // pred_check
          %p1211 = pneg %p212
        $region94: #{tpu_custom_call.1} parent=91 // pred_check_branch
          %1213 = sbr.rel (%p1211) target = $region96
        $region95: #{tpu_custom_call.1} parent=91 // pred_region
          %s1214 = sand.u32 %s197, 1
          %s1215 = scalar_lea.sflag [#allocation5], %s1214
          %s1216 = sand.u32 %s197, 1
          %s1217 = smul.addr %s1216, 24
          %s1218 = scalar_lea.vmem [#allocation12], %s1217
          %1219 = dma.done %s1215, 384
        $region96: #{tpu_custom_call.1} parent=91 // pred_fallthru
          _
      $region92: #{tpu_custom_call.1} parent=5 // pred_fallthru
        _
    $region6: #{tpu_custom_call.1} parent=1 // loop_footer
      %s30 = sadd.s32 1, %s26
    $region7: #{tpu_custom_call.1} parent=1 // loop_footer_branch
      %25 = sbr.rel target = $region3
    $region8: #{tpu_custom_call.1} parent=1 // loop_exit
      _
    %1220 = vsyncpa [#allocation4], 1
    %s1221 = scalar_lea.sflag [#allocation4], 1
    %1222 = vsyncpa %s1221, 1
    %1223 = vsyncpa [#allocation7], 1
    %s1224 = scalar_lea.sflag [#allocation7], 1
    %1225 = vsyncpa %s1224, 1
    %1226 = vsyncpa [#allocation10], 1
    %1227 = vsyncpa [#allocation5], 1
    %s1228 = scalar_lea.sflag [#allocation5], 1
    %1229 = vsyncpa %s1228, 1
    %1230 = vsyncpa [#allocation14], 1

</llo_original>
